<compile_context>
chip_gen: v5e
topology: v5e:2x2
jax: 0.10.0
libtpu: 0.0.40
codegen_flags: <defaults>
</compile_context>

<pallas_src>
import jax
import jax.numpy as jnp
from jax import lax
from jax.experimental import pallas as pl
from jax.experimental.pallas import tpu as pltpu


def _round_up(x, m):
    return (x + m - 1) // m * m


def _pad_gate_cols(w, H, Hp):
    """Pad the last (fused-gate) axis from 4H to 4Hp keeping [f|i|o|C] layout."""
    if H == Hp:
        return w
    pad = [(0, 0)] * (w.ndim - 1) + [(0, Hp - H)]
    chunks = [jnp.pad(w[..., g * H:(g + 1) * H], pad) for g in range(4)]
    return jnp.concatenate(chunks, axis=-1)


def _pick_time_block(T, Bblk, Hp, gate_bytes, wh_bytes, budget_bytes,
                     max_tc=128):
    """Largest Tc whose double-buffered gate slab fits the VMEM budget next to
    the resident W_h / h / c.  Returns (Tc, needs_tail_mask)."""
    resident = (2 * Hp * 4 * Hp * wh_bytes   # W_h (pipeline keeps 2 buffers)
                + 2 * Bblk * Hp * 4          # output / hidden-state block
                + Bblk * Hp * 4)             # cell-state scratch
    per_step = 2 * Bblk * 4 * Hp * gate_bytes  # double-buffered gates per t
    avail = budget_bytes - resident
    if avail > per_step:
        tc_cap = max(1, min(max_tc, avail // per_step))
    else:
        tc_cap = 1
    tc_cap = int(min(tc_cap, T))
    # Prefer an exact divisor of T (no tail masking) if it is not much smaller
    # than the VMEM-limited cap; otherwise take the cap and mask the tail.
    div = tc_cap
    while T % div != 0:
        div -= 1
    if 2 * div >= tc_cap:
        return div, False
    return tc_cap, True


def _make_kernel(T, Tc, Hp, needs_mask, unroll):
    """Build the recurrent kernel closed over static shape/config values."""

    def kernel(gx_ref, wh_ref, h_ref, c_sc):
        # gx_ref: (Tc, Bblk, 4Hp)  precomputed x@Wx+b (compute dtype)
        # wh_ref: (Hp, 4Hp)        recurrent weights, VMEM-resident (constant
        #                          block index across the grid)
        # h_ref : (Bblk, Hp) f32   output block == carried hidden state
        # c_sc  : (Bblk, Hp) f32   scratch cell state
        s = pl.program_id(1)       # time-block index (innermost, serial)

        @pl.when(s == 0)
        def _():
            h_ref[...] = jnp.zeros_like(h_ref)
            c_sc[...] = jnp.zeros_like(c_sc)

        wh = wh_ref[...]           # (Hp, 4Hp), stays in the compute dtype

        def sigmoid(x):
            # 1 EUP op (tanh) instead of exp + reciprocal.
            return 0.5 * jnp.tanh(0.5 * x) + 0.5

        def step(j, carry):
            h, c = carry
            # gates = (x_t @ Wx + b)  +  h @ Wh   -> (Bblk, 4Hp) in f32
            gates = gx_ref[j].astype(jnp.float32) + jnp.dot(
                h.astype(wh.dtype), wh, preferred_element_type=jnp.float32)
            f = sigmoid(gates[:, 0 * Hp:1 * Hp])
            i = sigmoid(gates[:, 1 * Hp:2 * Hp])
            o = sigmoid(gates[:, 2 * Hp:3 * Hp])
            cg = jnp.tanh(gates[:, 3 * Hp:4 * Hp])
            c_new = f * c + i * cg
            h_new = o * jnp.tanh(c_new)
            if needs_mask:
                valid = (s * Tc + j) < T          # padded tail timestep?
                h_new = jnp.where(valid, h_new, h)
                c_new = jnp.where(valid, c_new, c)
            return h_new, c_new

        h, c = lax.fori_loop(0, Tc, step, (h_ref[...], c_sc[...]),
                             unroll=unroll)
        h_ref[...] = h
        c_sc[...] = c

    return kernel


def lstm_forward(inputs, wx, wh, b, *,
                 compute_dtype=jnp.bfloat16,
                 vmem_budget_bytes=48 * 1024 * 1024):
    """inputs: (B, T, I) f32; wx: (I, 4H); wh: (H, 4H); b: (4H,).
    Gate order f, i, o, C.  Returns the final hidden state (B, H)
    (output_last=True).

    compute_dtype is used for the recurrent weights and the precomputed gate
    slab (state and elementwise math stay f32).  vmem_budget_bytes sizes Tc
    and vmem_limit_bytes: the 48 MiB default is safe on v7x (64 MiB/TC); on
    v5e/v6e (128 MiB) it can be raised to ~100 MiB for fewer grid steps."""
    B, T, I = inputs.shape
    H = wh.shape[0]

    # Tile alignment: lanes want 4H % 128 == 0, sublanes want B % 8 == 0.
    Hp = _round_up(H, 128)
    Bp = _round_up(B, 8)

    # Parallel batch axis (v7x has 2 TensorCores; time is serial so batch is
    # the only free parallelism).
    # TODO(synk): tune the batch-block count/size for production batch sizes
    # instead of this simple 1-or-2 split.
    nb = 2 if (Bp >= 16 and Bp % 16 == 0) else 1
    Bblk = Bp // nb

    gate_bytes = jnp.dtype(compute_dtype).itemsize
    Tc, needs_mask = _pick_time_block(T, Bblk, Hp, gate_bytes, gate_bytes,
                                      vmem_budget_bytes)
    ns = (T + Tc - 1) // Tc
    Tpad = ns * Tc

    # ---- parameter padding / casting ------------------------------------
    wx_p = _pad_gate_cols(wx, H, Hp)                          # (I, 4Hp)
    wh_p = _pad_gate_cols(wh, H, Hp)                          # (H, 4Hp)
    wh_p = jnp.pad(wh_p, ((0, Hp - H), (0, 0)))               # (Hp, 4Hp)
    wh_p = wh_p.astype(compute_dtype)
    b_p = _pad_gate_cols(b, H, Hp)                            # (4Hp,)

    # ---- phase 1: hoisted input projection (big parallel matmul) --------
    # Transpose the *small* x tensor so the matmul writes gates directly in
    # the (T, B, 4Hp) layout the kernel consumes.
    x_p = jnp.pad(inputs, ((0, Bp - B), (0, 0), (0, 0)))      # (Bp, T, I)
    x_tbi = jnp.transpose(x_p, (1, 0, 2))                     # (T, Bp, I)
    gates_x = jnp.einsum('tbi,ig->tbg', x_tbi, wx_p,
                         preferred_element_type=jnp.float32) + b_p
    gates_x = gates_x.astype(compute_dtype)                   # (T, Bp, 4Hp)
    if Tpad != T:
        gates_x = jnp.pad(gates_x, ((0, Tpad - T), (0, 0), (0, 0)))

    # Partial unroll once Hp is large (instruction memory / vreg pressure).
    unroll = min(Tc, 8) if Hp >= 512 else min(Tc, 32)

    kernel = _make_kernel(T, Tc, Hp, needs_mask, unroll)

    out = pl.pallas_call(
        kernel,
        out_shape=jax.ShapeDtypeStruct((Bp, Hp), jnp.float32),
        grid_spec=pltpu.PrefetchScalarGridSpec(
            num_scalar_prefetch=0,
            grid=(nb, ns),
            in_specs=[
                # Tc timesteps of precomputed gates per grid step (pipelined,
                # double-buffered by the runtime).
                pl.BlockSpec((Tc, Bblk, 4 * Hp), lambda bb, s: (s, bb, 0)),
                # Recurrent weights: constant block index -> fetched once by
                # the pipeline prologue (overlaps the first gate-slab DMA) and
                # VMEM-resident for the rest of the grid.
                pl.BlockSpec((Hp, 4 * Hp), lambda bb, s: (0, 0)),
            ],
            # Output block == carried hidden state (resident across the
            # serial time axis, written back when the batch block changes).
            out_specs=pl.BlockSpec((Bblk, Hp), lambda bb, s: (bb, 0)),
            scratch_shapes=[
                pltpu.VMEM((Bblk, Hp), jnp.float32),          # cell state
            ],
        ),
        compiler_params=pltpu.CompilerParams(
            dimension_semantics=("parallel", "arbitrary"),
            vmem_limit_bytes=int(max(vmem_budget_bytes, 16 * 1024 * 1024)),
        ),
    )(gates_x, wh_p)

    return out[:B, :H]


def init_params(key, input_size, hidden_size):
    """Deterministic init mimicking nn.Linear(input_size+hidden, hidden) x4
    with uniform(-1/sqrt(fan_in), 1/sqrt(fan_in)). Gate order: f, i, o, C."""
    fan_in = input_size + hidden_size
    bound = 1.0 / jnp.sqrt(jnp.array(fan_in, jnp.float32))
    keys = jax.random.split(key, 8)
    wxs, whs, bs = [], [], []
    for g in range(4):
        w = jax.random.uniform(
            keys[2 * g], (hidden_size, fan_in), jnp.float32, -bound, bound)
        bias = jax.random.uniform(
            keys[2 * g + 1], (hidden_size,), jnp.float32, -bound, bound)
        wxs.append(w[:, :input_size].T)      # (I, H)
        whs.append(w[:, input_size:].T)      # (H, H)
        bs.append(bias)
    wx = jnp.concatenate(wxs, axis=1)        # (I, 4H)
    wh = jnp.concatenate(whs, axis=1)        # (H, 4H)
    b = jnp.concatenate(bs, axis=0)          # (4H,)
    return wx, wh, b


def lstm_reference(inputs, wx, wh, b):
    """Pure-JAX f32 reference of the PyTorch forward (output_last=True)."""
    B, T, I = inputs.shape
    H = wh.shape[0]
    h = jnp.zeros((B, H), jnp.float32)
    c = jnp.zeros((B, H), jnp.float32)
    for t in range(T):
        x = inputs[:, t, :]
        gates = x @ wx + h @ wh + b
        f = jax.nn.sigmoid(gates[:, 0 * H:1 * H])
        i = jax.nn.sigmoid(gates[:, 1 * H:2 * H])
        o = jax.nn.sigmoid(gates[:, 2 * H:3 * H])
        Cg = jnp.tanh(gates[:, 3 * H:4 * H])
        c = f * c + i * Cg
        h = o * jnp.tanh(c)
    return h


if __name__ == "__main__":
    # Test 1: baseline small shape (single batch block, Tc == T, no tail).
    B, T, I, H = 4, 8, 16, 32
    k_x, k_p = jax.random.split(jax.random.PRNGKey(0))
    inputs = jax.random.normal(k_x, (B, T, I), jnp.float32)
    wx, wh, b = init_params(k_p, I, H)

    out = jax.block_until_ready(lstm_forward(inputs, wx, wh, b))
    ref = lstm_reference(inputs, wx, wh, b)
    assert out.shape == (B, H)
    # bf16 recurrent weights / gate slab -> looser parity vs the f32 reference
    assert jnp.allclose(out, ref, atol=3e-2, rtol=3e-2), (
        f"test1 max abs err = {jnp.max(jnp.abs(out - ref))}")

    # Test 2: exercises the 'parallel' batch axis (Bp=16 -> 2 blocks) and the
    # cdiv-grid + tail-mask path (tiny VMEM budget forces Tc < T, T=13 prime).
    B2, T2, I2, H2 = 13, 13, 24, 48
    k_x2, k_p2 = jax.random.split(jax.random.PRNGKey(1))
    inputs2 = jax.random.normal(k_x2, (B2, T2, I2), jnp.float32)
    wx2, wh2, b2 = init_params(k_p2, I2, H2)

    out2 = jax.block_until_ready(
        lstm_forward(inputs2, wx2, wh2, b2, vmem_budget_bytes=350_000))
    ref2 = lstm_reference(inputs2, wx2, wh2, b2)
    assert out2.shape == (B2, H2)
    assert jnp.allclose(out2, ref2, atol=3e-2, rtol=3e-2), (
        f"test2 max abs err = {jnp.max(jnp.abs(out2 - ref2))}")

    print("KERNEL_OK")
</pallas_src>

<mosaic_0001>
module attributes {stable_mosaic.version = 11 : i64} {
  func.func @kernel(%arg0: i32, %arg1: i32, %arg2: memref<8x8x512xbf16, #tpu.memory_space<vmem>>, %arg3: memref<128x512xbf16, #tpu.memory_space<vmem>>, %arg4: memref<8x128xf32, #tpu.memory_space<vmem>>, %arg5: memref<8x128xf32, #tpu.memory_space<vmem>>) attributes {dimension_semantics = [#tpu.dimension_semantics<parallel>, #tpu.dimension_semantics<arbitrary>], iteration_bounds = array<i64: 1, 1>, scalar_prefetch = 0 : i64, scratch_operands = 1 : i64, tpu.core_type = #tpu.core_type<tc>, window_params = [{transform_indices = @transform_0, window_bounds = array<i64: 8, 8, 512>}, {pipeline_mode = #tpu.pipeline_mode<synchronous>, transform_indices = @transform_1, window_bounds = array<i64: 128, 512>}, {transform_indices = @transform_2, window_bounds = array<i64: 8, 128>}]} {
    %c0_i32 = arith.constant 0 : i32
    %0 = arith.cmpi eq, %arg1, %c0_i32 : i32
    %1 = arith.extui %0 : i1 to i32
    %c0_i32_0 = arith.constant 0 : i32
    %2 = arith.cmpi ne, %1, %c0_i32_0 : i32
    scf.if %2 {
      %cst_106 = arith.constant 0.000000e+00 : f32
      %312 = vector.broadcast %cst_106 : f32 to vector<8x128xf32>
      %c0_107 = arith.constant 0 : index
      %c0_108 = arith.constant 0 : index
      %313 = vector.load %arg4[%c0_107, %c0_108] : memref<8x128xf32, #tpu.memory_space<vmem>>, vector<8x128xf32>
      tpu.vector_store %arg4[%c0_107, %c0_108], %312 {strides = array<i32>} : memref<8x128xf32, #tpu.memory_space<vmem>>, vector<8x128xf32>,
      %cst_109 = arith.constant 0.000000e+00 : f32
      %314 = vector.broadcast %cst_109 : f32 to vector<8x128xf32>
      %c0_110 = arith.constant 0 : index
      %c0_111 = arith.constant 0 : index
      %315 = vector.load %arg5[%c0_110, %c0_111] : memref<8x128xf32, #tpu.memory_space<vmem>>, vector<8x128xf32>
      tpu.vector_store %arg5[%c0_110, %c0_111], %314 {strides = array<i32>} : memref<8x128xf32, #tpu.memory_space<vmem>>, vector<8x128xf32>,
    } else {
    }
    %c0 = arith.constant 0 : index
    %c0_1 = arith.constant 0 : index
    %3 = vector.load %arg3[%c0, %c0_1] : memref<128x512xbf16, #tpu.memory_space<vmem>>, vector<128x512xbf16>
    %c0_2 = arith.constant 0 : index
    %c0_3 = arith.constant 0 : index
    %4 = vector.load %arg4[%c0_2, %c0_3] : memref<8x128xf32, #tpu.memory_space<vmem>>, vector<8x128xf32>
    %c0_4 = arith.constant 0 : index
    %c0_5 = arith.constant 0 : index
    %5 = vector.load %arg5[%c0_4, %c0_5] : memref<8x128xf32, #tpu.memory_space<vmem>>, vector<8x128xf32>
    %c0_i32_6 = arith.constant 0 : i32
    %6 = arith.index_cast %c0_i32_6 : i32 to index
    %c0_7 = arith.constant 0 : index
    %c0_8 = arith.constant 0 : index
    %7 = vector.load %arg2[%6, %c0_7, %c0_8] : memref<8x8x512xbf16, #tpu.memory_space<vmem>>, vector<1x8x512xbf16>
    %8 = vector.shape_cast %7 : vector<1x8x512xbf16> to vector<8x512xbf16>
    %9 = arith.extf %8 : vector<8x512xbf16> to vector<8x512xf32>
    %10 = arith.truncf %4 : vector<8x128xf32> to vector<8x128xbf16>
    %cst = arith.constant dense<0.000000e+00> : vector<8x512xf32>
    %11 = tpu.matmul %10, %3, %cst {dimension_numbers = #tpu.dot_dimension_numbers<[1], [0], [0], [1], [0, 0, 1, 1], [], []>} : vector<8x128xbf16>, vector<128x512xbf16>, vector<8x512xf32> -> vector<8x512xf32>
    %12 = arith.addf %9, %11 : vector<8x512xf32>
    %13 = vector.extract_strided_slice %12 {offsets = [0, 0], sizes = [8, 128], strides = [1, 1]} : vector<8x512xf32> to vector<8x128xf32>
    %cst_9 = arith.constant 5.000000e-01 : f32
    %14 = vector.broadcast %cst_9 : f32 to vector<8x128xf32>
    %15 = arith.mulf %14, %13 : vector<8x128xf32>
    %16 = math.tanh %15 : vector<8x128xf32>
    %cst_10 = arith.constant 5.000000e-01 : f32
    %17 = vector.broadcast %cst_10 : f32 to vector<8x128xf32>
    %18 = arith.mulf %17, %16 : vector<8x128xf32>
    %cst_11 = arith.constant 5.000000e-01 : f32
    %19 = vector.broadcast %cst_11 : f32 to vector<8x128xf32>
    %20 = arith.addf %18, %19 : vector<8x128xf32>
    %21 = vector.extract_strided_slice %12 {offsets = [0, 128], sizes = [8, 128], strides = [1, 1]} : vector<8x512xf32> to vector<8x128xf32>
    %cst_12 = arith.constant 5.000000e-01 : f32
    %22 = vector.broadcast %cst_12 : f32 to vector<8x128xf32>
    %23 = arith.mulf %22, %21 : vector<8x128xf32>
    %24 = math.tanh %23 : vector<8x128xf32>
    %cst_13 = arith.constant 5.000000e-01 : f32
    %25 = vector.broadcast %cst_13 : f32 to vector<8x128xf32>
    %26 = arith.mulf %25, %24 : vector<8x128xf32>
    %cst_14 = arith.constant 5.000000e-01 : f32
    %27 = vector.broadcast %cst_14 : f32 to vector<8x128xf32>
    %28 = arith.addf %26, %27 : vector<8x128xf32>
    %29 = vector.extract_strided_slice %12 {offsets = [0, 256], sizes = [8, 128], strides = [1, 1]} : vector<8x512xf32> to vector<8x128xf32>
    %cst_15 = arith.constant 5.000000e-01 : f32
    %30 = vector.broadcast %cst_15 : f32 to vector<8x128xf32>
    %31 = arith.mulf %30, %29 : vector<8x128xf32>
    %32 = math.tanh %31 : vector<8x128xf32>
    %cst_16 = arith.constant 5.000000e-01 : f32
    %33 = vector.broadcast %cst_16 : f32 to vector<8x128xf32>
    %34 = arith.mulf %33, %32 : vector<8x128xf32>
    %cst_17 = arith.constant 5.000000e-01 : f32
    %35 = vector.broadcast %cst_17 : f32 to vector<8x128xf32>
    %36 = arith.addf %34, %35 : vector<8x128xf32>
    %37 = vector.extract_strided_slice %12 {offsets = [0, 384], sizes = [8, 128], strides = [1, 1]} : vector<8x512xf32> to vector<8x128xf32>
    %38 = math.tanh %37 : vector<8x128xf32>
    %39 = arith.mulf %20, %5 : vector<8x128xf32>
    %40 = arith.mulf %28, %38 : vector<8x128xf32>
    %41 = arith.addf %39, %40 : vector<8x128xf32>
    %42 = math.tanh %41 : vector<8x128xf32>
    %43 = arith.mulf %36, %42 : vector<8x128xf32>
    %c1_i32 = arith.constant 1 : i32
    %44 = arith.index_cast %c1_i32 : i32 to index
    %c0_18 = arith.constant 0 : index
    %c0_19 = arith.constant 0 : index
    %45 = vector.load %arg2[%44, %c0_18, %c0_19] : memref<8x8x512xbf16, #tpu.memory_space<vmem>>, vector<1x8x512xbf16>
    %46 = vector.shape_cast %45 : vector<1x8x512xbf16> to vector<8x512xbf16>
    %47 = arith.extf %46 : vector<8x512xbf16> to vector<8x512xf32>
    %48 = arith.truncf %43 : vector<8x128xf32> to vector<8x128xbf16>
    %cst_20 = arith.constant dense<0.000000e+00> : vector<8x512xf32>
    %49 = tpu.matmul %48, %3, %cst_20 {dimension_numbers = #tpu.dot_dimension_numbers<[1], [0], [0], [1], [0, 0, 1, 1], [], []>} : vector<8x128xbf16>, vector<128x512xbf16>, vector<8x512xf32> -> vector<8x512xf32>
    %50 = arith.addf %47, %49 : vector<8x512xf32>
    %51 = vector.extract_strided_slice %50 {offsets = [0, 0], sizes = [8, 128], strides = [1, 1]} : vector<8x512xf32> to vector<8x128xf32>
    %cst_21 = arith.constant 5.000000e-01 : f32
    %52 = vector.broadcast %cst_21 : f32 to vector<8x128xf32>
    %53 = arith.mulf %52, %51 : vector<8x128xf32>
    %54 = math.tanh %53 : vector<8x128xf32>
    %cst_22 = arith.constant 5.000000e-01 : f32
    %55 = vector.broadcast %cst_22 : f32 to vector<8x128xf32>
    %56 = arith.mulf %55, %54 : vector<8x128xf32>
    %cst_23 = arith.constant 5.000000e-01 : f32
    %57 = vector.broadcast %cst_23 : f32 to vector<8x128xf32>
    %58 = arith.addf %56, %57 : vector<8x128xf32>
    %59 = vector.extract_strided_slice %50 {offsets = [0, 128], sizes = [8, 128], strides = [1, 1]} : vector<8x512xf32> to vector<8x128xf32>
    %cst_24 = arith.constant 5.000000e-01 : f32
    %60 = vector.broadcast %cst_24 : f32 to vector<8x128xf32>
    %61 = arith.mulf %60, %59 : vector<8x128xf32>
    %62 = math.tanh %61 : vector<8x128xf32>
    %cst_25 = arith.constant 5.000000e-01 : f32
    %63 = vector.broadcast %cst_25 : f32 to vector<8x128xf32>
    %64 = arith.mulf %63, %62 : vector<8x128xf32>
    %cst_26 = arith.constant 5.000000e-01 : f32
    %65 = vector.broadcast %cst_26 : f32 to vector<8x128xf32>
    %66 = arith.addf %64, %65 : vector<8x128xf32>
    %67 = vector.extract_strided_slice %50 {offsets = [0, 256], sizes = [8, 128], strides = [1, 1]} : vector<8x512xf32> to vector<8x128xf32>
    %cst_27 = arith.constant 5.000000e-01 : f32
    %68 = vector.broadcast %cst_27 : f32 to vector<8x128xf32>
    %69 = arith.mulf %68, %67 : vector<8x128xf32>
    %70 = math.tanh %69 : vector<8x128xf32>
    %cst_28 = arith.constant 5.000000e-01 : f32
    %71 = vector.broadcast %cst_28 : f32 to vector<8x128xf32>
    %72 = arith.mulf %71, %70 : vector<8x128xf32>
    %cst_29 = arith.constant 5.000000e-01 : f32
    %73 = vector.broadcast %cst_29 : f32 to vector<8x128xf32>
    %74 = arith.addf %72, %73 : vector<8x128xf32>
    %75 = vector.extract_strided_slice %50 {offsets = [0, 384], sizes = [8, 128], strides = [1, 1]} : vector<8x512xf32> to vector<8x128xf32>
    %76 = math.tanh %75 : vector<8x128xf32>
    %77 = arith.mulf %58, %41 : vector<8x128xf32>
    %78 = arith.mulf %66, %76 : vector<8x128xf32>
    %79 = arith.addf %77, %78 : vector<8x128xf32>
    %80 = math.tanh %79 : vector<8x128xf32>
    %81 = arith.mulf %74, %80 : vector<8x128xf32>
    %c2_i32 = arith.constant 2 : i32
    %82 = arith.index_cast %c2_i32 : i32 to index
    %c0_30 = arith.constant 0 : index
    %c0_31 = arith.constant 0 : index
    %83 = vector.load %arg2[%82, %c0_30, %c0_31] : memref<8x8x512xbf16, #tpu.memory_space<vmem>>, vector<1x8x512xbf16>
    %84 = vector.shape_cast %83 : vector<1x8x512xbf16> to vector<8x512xbf16>
    %85 = arith.extf %84 : vector<8x512xbf16> to vector<8x512xf32>
    %86 = arith.truncf %81 : vector<8x128xf32> to vector<8x128xbf16>
    %cst_32 = arith.constant dense<0.000000e+00> : vector<8x512xf32>
    %87 = tpu.matmul %86, %3, %cst_32 {dimension_numbers = #tpu.dot_dimension_numbers<[1], [0], [0], [1], [0, 0, 1, 1], [], []>} : vector<8x128xbf16>, vector<128x512xbf16>, vector<8x512xf32> -> vector<8x512xf32>
    %88 = arith.addf %85, %87 : vector<8x512xf32>
    %89 = vector.extract_strided_slice %88 {offsets = [0, 0], sizes = [8, 128], strides = [1, 1]} : vector<8x512xf32> to vector<8x128xf32>
    %cst_33 = arith.constant 5.000000e-01 : f32
    %90 = vector.broadcast %cst_33 : f32 to vector<8x128xf32>
    %91 = arith.mulf %90, %89 : vector<8x128xf32>
    %92 = math.tanh %91 : vector<8x128xf32>
    %cst_34 = arith.constant 5.000000e-01 : f32
    %93 = vector.broadcast %cst_34 : f32 to vector<8x128xf32>
    %94 = arith.mulf %93, %92 : vector<8x128xf32>
    %cst_35 = arith.constant 5.000000e-01 : f32
    %95 = vector.broadcast %cst_35 : f32 to vector<8x128xf32>
    %96 = arith.addf %94, %95 : vector<8x128xf32>
    %97 = vector.extract_strided_slice %88 {offsets = [0, 128], sizes = [8, 128], strides = [1, 1]} : vector<8x512xf32> to vector<8x128xf32>
    %cst_36 = arith.constant 5.000000e-01 : f32
    %98 = vector.broadcast %cst_36 : f32 to vector<8x128xf32>
    %99 = arith.mulf %98, %97 : vector<8x128xf32>
    %100 = math.tanh %99 : vector<8x128xf32>
    %cst_37 = arith.constant 5.000000e-01 : f32
    %101 = vector.broadcast %cst_37 : f32 to vector<8x128xf32>
    %102 = arith.mulf %101, %100 : vector<8x128xf32>
    %cst_38 = arith.constant 5.000000e-01 : f32
    %103 = vector.broadcast %cst_38 : f32 to vector<8x128xf32>
    %104 = arith.addf %102, %103 : vector<8x128xf32>
    %105 = vector.extract_strided_slice %88 {offsets = [0, 256], sizes = [8, 128], strides = [1, 1]} : vector<8x512xf32> to vector<8x128xf32>
    %cst_39 = arith.constant 5.000000e-01 : f32
    %106 = vector.broadcast %cst_39 : f32 to vector<8x128xf32>
    %107 = arith.mulf %106, %105 : vector<8x128xf32>
    %108 = math.tanh %107 : vector<8x128xf32>
    %cst_40 = arith.constant 5.000000e-01 : f32
    %109 = vector.broadcast %cst_40 : f32 to vector<8x128xf32>
    %110 = arith.mulf %109, %108 : vector<8x128xf32>
    %cst_41 = arith.constant 5.000000e-01 : f32
    %111 = vector.broadcast %cst_41 : f32 to vector<8x128xf32>
    %112 = arith.addf %110, %111 : vector<8x128xf32>
    %113 = vector.extract_strided_slice %88 {offsets = [0, 384], sizes = [8, 128], strides = [1, 1]} : vector<8x512xf32> to vector<8x128xf32>
    %114 = math.tanh %113 : vector<8x128xf32>
    %115 = arith.mulf %96, %79 : vector<8x128xf32>
    %116 = arith.mulf %104, %114 : vector<8x128xf32>
    %117 = arith.addf %115, %116 : vector<8x128xf32>
    %118 = math.tanh %117 : vector<8x128xf32>
    %119 = arith.mulf %112, %118 : vector<8x128xf32>
    %c3_i32 = arith.constant 3 : i32
    %120 = arith.index_cast %c3_i32 : i32 to index
    %c0_42 = arith.constant 0 : index
    %c0_43 = arith.constant 0 : index
    %121 = vector.load %arg2[%120, %c0_42, %c0_43] : memref<8x8x512xbf16, #tpu.memory_space<vmem>>, vector<1x8x512xbf16>
    %122 = vector.shape_cast %121 : vector<1x8x512xbf16> to vector<8x512xbf16>
    %123 = arith.extf %122 : vector<8x512xbf16> to vector<8x512xf32>
    %124 = arith.truncf %119 : vector<8x128xf32> to vector<8x128xbf16>
    %cst_44 = arith.constant dense<0.000000e+00> : vector<8x512xf32>
    %125 = tpu.matmul %124, %3, %cst_44 {dimension_numbers = #tpu.dot_dimension_numbers<[1], [0], [0], [1], [0, 0, 1, 1], [], []>} : vector<8x128xbf16>, vector<128x512xbf16>, vector<8x512xf32> -> vector<8x512xf32>
    %126 = arith.addf %123, %125 : vector<8x512xf32>
    %127 = vector.extract_strided_slice %126 {offsets = [0, 0], sizes = [8, 128], strides = [1, 1]} : vector<8x512xf32> to vector<8x128xf32>
    %cst_45 = arith.constant 5.000000e-01 : f32
    %128 = vector.broadcast %cst_45 : f32 to vector<8x128xf32>
    %129 = arith.mulf %128, %127 : vector<8x128xf32>
    %130 = math.tanh %129 : vector<8x128xf32>
    %cst_46 = arith.constant 5.000000e-01 : f32
    %131 = vector.broadcast %cst_46 : f32 to vector<8x128xf32>
    %132 = arith.mulf %131, %130 : vector<8x128xf32>
    %cst_47 = arith.constant 5.000000e-01 : f32
    %133 = vector.broadcast %cst_47 : f32 to vector<8x128xf32>
    %134 = arith.addf %132, %133 : vector<8x128xf32>
    %135 = vector.extract_strided_slice %126 {offsets = [0, 128], sizes = [8, 128], strides = [1, 1]} : vector<8x512xf32> to vector<8x128xf32>
    %cst_48 = arith.constant 5.000000e-01 : f32
    %136 = vector.broadcast %cst_48 : f32 to vector<8x128xf32>
    %137 = arith.mulf %136, %135 : vector<8x128xf32>
    %138 = math.tanh %137 : vector<8x128xf32>
    %cst_49 = arith.constant 5.000000e-01 : f32
    %139 = vector.broadcast %cst_49 : f32 to vector<8x128xf32>
    %140 = arith.mulf %139, %138 : vector<8x128xf32>
    %cst_50 = arith.constant 5.000000e-01 : f32
    %141 = vector.broadcast %cst_50 : f32 to vector<8x128xf32>
    %142 = arith.addf %140, %141 : vector<8x128xf32>
    %143 = vector.extract_strided_slice %126 {offsets = [0, 256], sizes = [8, 128], strides = [1, 1]} : vector<8x512xf32> to vector<8x128xf32>
    %cst_51 = arith.constant 5.000000e-01 : f32
    %144 = vector.broadcast %cst_51 : f32 to vector<8x128xf32>
    %145 = arith.mulf %144, %143 : vector<8x128xf32>
    %146 = math.tanh %145 : vector<8x128xf32>
    %cst_52 = arith.constant 5.000000e-01 : f32
    %147 = vector.broadcast %cst_52 : f32 to vector<8x128xf32>
    %148 = arith.mulf %147, %146 : vector<8x128xf32>
    %cst_53 = arith.constant 5.000000e-01 : f32
    %149 = vector.broadcast %cst_53 : f32 to vector<8x128xf32>
    %150 = arith.addf %148, %149 : vector<8x128xf32>
    %151 = vector.extract_strided_slice %126 {offsets = [0, 384], sizes = [8, 128], strides = [1, 1]} : vector<8x512xf32> to vector<8x128xf32>
    %152 = math.tanh %151 : vector<8x128xf32>
    %153 = arith.mulf %134, %117 : vector<8x128xf32>
    %154 = arith.mulf %142, %152 : vector<8x128xf32>
    %155 = arith.addf %153, %154 : vector<8x128xf32>
    %156 = math.tanh %155 : vector<8x128xf32>
    %157 = arith.mulf %150, %156 : vector<8x128xf32>
    %c4_i32 = arith.constant 4 : i32
    %158 = arith.index_cast %c4_i32 : i32 to index
    %c0_54 = arith.constant 0 : index
    %c0_55 = arith.constant 0 : index
    %159 = vector.load %arg2[%158, %c0_54, %c0_55] : memref<8x8x512xbf16, #tpu.memory_space<vmem>>, vector<1x8x512xbf16>
    %160 = vector.shape_cast %159 : vector<1x8x512xbf16> to vector<8x512xbf16>
    %161 = arith.extf %160 : vector<8x512xbf16> to vector<8x512xf32>
    %162 = arith.truncf %157 : vector<8x128xf32> to vector<8x128xbf16>
    %cst_56 = arith.constant dense<0.000000e+00> : vector<8x512xf32>
    %163 = tpu.matmul %162, %3, %cst_56 {dimension_numbers = #tpu.dot_dimension_numbers<[1], [0], [0], [1], [0, 0, 1, 1], [], []>} : vector<8x128xbf16>, vector<128x512xbf16>, vector<8x512xf32> -> vector<8x512xf32>
    %164 = arith.addf %161, %163 : vector<8x512xf32>
    %165 = vector.extract_strided_slice %164 {offsets = [0, 0], sizes = [8, 128], strides = [1, 1]} : vector<8x512xf32> to vector<8x128xf32>
    %cst_57 = arith.constant 5.000000e-01 : f32
    %166 = vector.broadcast %cst_57 : f32 to vector<8x128xf32>
    %167 = arith.mulf %166, %165 : vector<8x128xf32>
    %168 = math.tanh %167 : vector<8x128xf32>
    %cst_58 = arith.constant 5.000000e-01 : f32
    %169 = vector.broadcast %cst_58 : f32 to vector<8x128xf32>
    %170 = arith.mulf %169, %168 : vector<8x128xf32>
    %cst_59 = arith.constant 5.000000e-01 : f32
    %171 = vector.broadcast %cst_59 : f32 to vector<8x128xf32>
    %172 = arith.addf %170, %171 : vector<8x128xf32>
    %173 = vector.extract_strided_slice %164 {offsets = [0, 128], sizes = [8, 128], strides = [1, 1]} : vector<8x512xf32> to vector<8x128xf32>
    %cst_60 = arith.constant 5.000000e-01 : f32
    %174 = vector.broadcast %cst_60 : f32 to vector<8x128xf32>
    %175 = arith.mulf %174, %173 : vector<8x128xf32>
    %176 = math.tanh %175 : vector<8x128xf32>
    %cst_61 = arith.constant 5.000000e-01 : f32
    %177 = vector.broadcast %cst_61 : f32 to vector<8x128xf32>
    %178 = arith.mulf %177, %176 : vector<8x128xf32>
    %cst_62 = arith.constant 5.000000e-01 : f32
    %179 = vector.broadcast %cst_62 : f32 to vector<8x128xf32>
    %180 = arith.addf %178, %179 : vector<8x128xf32>
    %181 = vector.extract_strided_slice %164 {offsets = [0, 256], sizes = [8, 128], strides = [1, 1]} : vector<8x512xf32> to vector<8x128xf32>
    %cst_63 = arith.constant 5.000000e-01 : f32
    %182 = vector.broadcast %cst_63 : f32 to vector<8x128xf32>
    %183 = arith.mulf %182, %181 : vector<8x128xf32>
    %184 = math.tanh %183 : vector<8x128xf32>
    %cst_64 = arith.constant 5.000000e-01 : f32
    %185 = vector.broadcast %cst_64 : f32 to vector<8x128xf32>
    %186 = arith.mulf %185, %184 : vector<8x128xf32>
    %cst_65 = arith.constant 5.000000e-01 : f32
    %187 = vector.broadcast %cst_65 : f32 to vector<8x128xf32>
    %188 = arith.addf %186, %187 : vector<8x128xf32>
    %189 = vector.extract_strided_slice %164 {offsets = [0, 384], sizes = [8, 128], strides = [1, 1]} : vector<8x512xf32> to vector<8x128xf32>
    %190 = math.tanh %189 : vector<8x128xf32>
    %191 = arith.mulf %172, %155 : vector<8x128xf32>
    %192 = arith.mulf %180, %190 : vector<8x128xf32>
    %193 = arith.addf %191, %192 : vector<8x128xf32>
    %194 = math.tanh %193 : vector<8x128xf32>
    %195 = arith.mulf %188, %194 : vector<8x128xf32>
    %c5_i32 = arith.constant 5 : i32
    %196 = arith.index_cast %c5_i32 : i32 to index
    %c0_66 = arith.constant 0 : index
    %c0_67 = arith.constant 0 : index
    %197 = vector.load %arg2[%196, %c0_66, %c0_67] : memref<8x8x512xbf16, #tpu.memory_space<vmem>>, vector<1x8x512xbf16>
    %198 = vector.shape_cast %197 : vector<1x8x512xbf16> to vector<8x512xbf16>
    %199 = arith.extf %198 : vector<8x512xbf16> to vector<8x512xf32>
    %200 = arith.truncf %195 : vector<8x128xf32> to vector<8x128xbf16>
    %cst_68 = arith.constant dense<0.000000e+00> : vector<8x512xf32>
    %201 = tpu.matmul %200, %3, %cst_68 {dimension_numbers = #tpu.dot_dimension_numbers<[1], [0], [0], [1], [0, 0, 1, 1], [], []>} : vector<8x128xbf16>, vector<128x512xbf16>, vector<8x512xf32> -> vector<8x512xf32>
    %202 = arith.addf %199, %201 : vector<8x512xf32>
    %203 = vector.extract_strided_slice %202 {offsets = [0, 0], sizes = [8, 128], strides = [1, 1]} : vector<8x512xf32> to vector<8x128xf32>
    %cst_69 = arith.constant 5.000000e-01 : f32
    %204 = vector.broadcast %cst_69 : f32 to vector<8x128xf32>
    %205 = arith.mulf %204, %203 : vector<8x128xf32>
    %206 = math.tanh %205 : vector<8x128xf32>
    %cst_70 = arith.constant 5.000000e-01 : f32
    %207 = vector.broadcast %cst_70 : f32 to vector<8x128xf32>
    %208 = arith.mulf %207, %206 : vector<8x128xf32>
    %cst_71 = arith.constant 5.000000e-01 : f32
    %209 = vector.broadcast %cst_71 : f32 to vector<8x128xf32>
    %210 = arith.addf %208, %209 : vector<8x128xf32>
    %211 = vector.extract_strided_slice %202 {offsets = [0, 128], sizes = [8, 128], strides = [1, 1]} : vector<8x512xf32> to vector<8x128xf32>
    %cst_72 = arith.constant 5.000000e-01 : f32
    %212 = vector.broadcast %cst_72 : f32 to vector<8x128xf32>
    %213 = arith.mulf %212, %211 : vector<8x128xf32>
    %214 = math.tanh %213 : vector<8x128xf32>
    %cst_73 = arith.constant 5.000000e-01 : f32
    %215 = vector.broadcast %cst_73 : f32 to vector<8x128xf32>
    %216 = arith.mulf %215, %214 : vector<8x128xf32>
    %cst_74 = arith.constant 5.000000e-01 : f32
    %217 = vector.broadcast %cst_74 : f32 to vector<8x128xf32>
    %218 = arith.addf %216, %217 : vector<8x128xf32>
    %219 = vector.extract_strided_slice %202 {offsets = [0, 256], sizes = [8, 128], strides = [1, 1]} : vector<8x512xf32> to vector<8x128xf32>
    %cst_75 = arith.constant 5.000000e-01 : f32
    %220 = vector.broadcast %cst_75 : f32 to vector<8x128xf32>
    %221 = arith.mulf %220, %219 : vector<8x128xf32>
    %222 = math.tanh %221 : vector<8x128xf32>
    %cst_76 = arith.constant 5.000000e-01 : f32
    %223 = vector.broadcast %cst_76 : f32 to vector<8x128xf32>
    %224 = arith.mulf %223, %222 : vector<8x128xf32>
    %cst_77 = arith.constant 5.000000e-01 : f32
    %225 = vector.broadcast %cst_77 : f32 to vector<8x128xf32>
    %226 = arith.addf %224, %225 : vector<8x128xf32>
    %227 = vector.extract_strided_slice %202 {offsets = [0, 384], sizes = [8, 128], strides = [1, 1]} : vector<8x512xf32> to vector<8x128xf32>
    %228 = math.tanh %227 : vector<8x128xf32>
    %229 = arith.mulf %210, %193 : vector<8x128xf32>
    %230 = arith.mulf %218, %228 : vector<8x128xf32>
    %231 = arith.addf %229, %230 : vector<8x128xf32>
    %232 = math.tanh %231 : vector<8x128xf32>
    %233 = arith.mulf %226, %232 : vector<8x128xf32>
    %c6_i32 = arith.constant 6 : i32
    %234 = arith.index_cast %c6_i32 : i32 to index
    %c0_78 = arith.constant 0 : index
    %c0_79 = arith.constant 0 : index
    %235 = vector.load %arg2[%234, %c0_78, %c0_79] : memref<8x8x512xbf16, #tpu.memory_space<vmem>>, vector<1x8x512xbf16>
    %236 = vector.shape_cast %235 : vector<1x8x512xbf16> to vector<8x512xbf16>
    %237 = arith.extf %236 : vector<8x512xbf16> to vector<8x512xf32>
    %238 = arith.truncf %233 : vector<8x128xf32> to vector<8x128xbf16>
    %cst_80 = arith.constant dense<0.000000e+00> : vector<8x512xf32>
    %239 = tpu.matmul %238, %3, %cst_80 {dimension_numbers = #tpu.dot_dimension_numbers<[1], [0], [0], [1], [0, 0, 1, 1], [], []>} : vector<8x128xbf16>, vector<128x512xbf16>, vector<8x512xf32> -> vector<8x512xf32>
    %240 = arith.addf %237, %239 : vector<8x512xf32>
    %241 = vector.extract_strided_slice %240 {offsets = [0, 0], sizes = [8, 128], strides = [1, 1]} : vector<8x512xf32> to vector<8x128xf32>
    %cst_81 = arith.constant 5.000000e-01 : f32
    %242 = vector.broadcast %cst_81 : f32 to vector<8x128xf32>
    %243 = arith.mulf %242, %241 : vector<8x128xf32>
    %244 = math.tanh %243 : vector<8x128xf32>
    %cst_82 = arith.constant 5.000000e-01 : f32
    %245 = vector.broadcast %cst_82 : f32 to vector<8x128xf32>
    %246 = arith.mulf %245, %244 : vector<8x128xf32>
    %cst_83 = arith.constant 5.000000e-01 : f32
    %247 = vector.broadcast %cst_83 : f32 to vector<8x128xf32>
    %248 = arith.addf %246, %247 : vector<8x128xf32>
    %249 = vector.extract_strided_slice %240 {offsets = [0, 128], sizes = [8, 128], strides = [1, 1]} : vector<8x512xf32> to vector<8x128xf32>
    %cst_84 = arith.constant 5.000000e-01 : f32
    %250 = vector.broadcast %cst_84 : f32 to vector<8x128xf32>
    %251 = arith.mulf %250, %249 : vector<8x128xf32>
    %252 = math.tanh %251 : vector<8x128xf32>
    %cst_85 = arith.constant 5.000000e-01 : f32
    %253 = vector.broadcast %cst_85 : f32 to vector<8x128xf32>
    %254 = arith.mulf %253, %252 : vector<8x128xf32>
    %cst_86 = arith.constant 5.000000e-01 : f32
    %255 = vector.broadcast %cst_86 : f32 to vector<8x128xf32>
    %256 = arith.addf %254, %255 : vector<8x128xf32>
    %257 = vector.extract_strided_slice %240 {offsets = [0, 256], sizes = [8, 128], strides = [1, 1]} : vector<8x512xf32> to vector<8x128xf32>
    %cst_87 = arith.constant 5.000000e-01 : f32
    %258 = vector.broadcast %cst_87 : f32 to vector<8x128xf32>
    %259 = arith.mulf %258, %257 : vector<8x128xf32>
    %260 = math.tanh %259 : vector<8x128xf32>
    %cst_88 = arith.constant 5.000000e-01 : f32
    %261 = vector.broadcast %cst_88 : f32 to vector<8x128xf32>
    %262 = arith.mulf %261, %260 : vector<8x128xf32>
    %cst_89 = arith.constant 5.000000e-01 : f32
    %263 = vector.broadcast %cst_89 : f32 to vector<8x128xf32>
    %264 = arith.addf %262, %263 : vector<8x128xf32>
    %265 = vector.extract_strided_slice %240 {offsets = [0, 384], sizes = [8, 128], strides = [1, 1]} : vector<8x512xf32> to vector<8x128xf32>
    %266 = math.tanh %265 : vector<8x128xf32>
    %267 = arith.mulf %248, %231 : vector<8x128xf32>
    %268 = arith.mulf %256, %266 : vector<8x128xf32>
    %269 = arith.addf %267, %268 : vector<8x128xf32>
    %270 = math.tanh %269 : vector<8x128xf32>
    %271 = arith.mulf %264, %270 : vector<8x128xf32>
    %c7_i32 = arith.constant 7 : i32
    %272 = arith.index_cast %c7_i32 : i32 to index
    %c0_90 = arith.constant 0 : index
    %c0_91 = arith.constant 0 : index
    %273 = vector.load %arg2[%272, %c0_90, %c0_91] : memref<8x8x512xbf16, #tpu.memory_space<vmem>>, vector<1x8x512xbf16>
    %274 = vector.shape_cast %273 : vector<1x8x512xbf16> to vector<8x512xbf16>
    %275 = arith.extf %274 : vector<8x512xbf16> to vector<8x512xf32>
    %276 = arith.truncf %271 : vector<8x128xf32> to vector<8x128xbf16>
    %cst_92 = arith.constant dense<0.000000e+00> : vector<8x512xf32>
    %277 = tpu.matmul %276, %3, %cst_92 {dimension_numbers = #tpu.dot_dimension_numbers<[1], [0], [0], [1], [0, 0, 1, 1], [], []>} : vector<8x128xbf16>, vector<128x512xbf16>, vector<8x512xf32> -> vector<8x512xf32>
    %278 = arith.addf %275, %277 : vector<8x512xf32>
    %279 = vector.extract_strided_slice %278 {offsets = [0, 0], sizes = [8, 128], strides = [1, 1]} : vector<8x512xf32> to vector<8x128xf32>
    %cst_93 = arith.constant 5.000000e-01 : f32
    %280 = vector.broadcast %cst_93 : f32 to vector<8x128xf32>
    %281 = arith.mulf %280, %279 : vector<8x128xf32>
    %282 = math.tanh %281 : vector<8x128xf32>
    %cst_94 = arith.constant 5.000000e-01 : f32
    %283 = vector.broadcast %cst_94 : f32 to vector<8x128xf32>
    %284 = arith.mulf %283, %282 : vector<8x128xf32>
    %cst_95 = arith.constant 5.000000e-01 : f32
    %285 = vector.broadcast %cst_95 : f32 to vector<8x128xf32>
    %286 = arith.addf %284, %285 : vector<8x128xf32>
    %287 = vector.extract_strided_slice %278 {offsets = [0, 128], sizes = [8, 128], strides = [1, 1]} : vector<8x512xf32> to vector<8x128xf32>
    %cst_96 = arith.constant 5.000000e-01 : f32
    %288 = vector.broadcast %cst_96 : f32 to vector<8x128xf32>
    %289 = arith.mulf %288, %287 : vector<8x128xf32>
    %290 = math.tanh %289 : vector<8x128xf32>
    %cst_97 = arith.constant 5.000000e-01 : f32
    %291 = vector.broadcast %cst_97 : f32 to vector<8x128xf32>
    %292 = arith.mulf %291, %290 : vector<8x128xf32>
    %cst_98 = arith.constant 5.000000e-01 : f32
    %293 = vector.broadcast %cst_98 : f32 to vector<8x128xf32>
    %294 = arith.addf %292, %293 : vector<8x128xf32>
    %295 = vector.extract_strided_slice %278 {offsets = [0, 256], sizes = [8, 128], strides = [1, 1]} : vector<8x512xf32> to vector<8x128xf32>
    %cst_99 = arith.constant 5.000000e-01 : f32
    %296 = vector.broadcast %cst_99 : f32 to vector<8x128xf32>
    %297 = arith.mulf %296, %295 : vector<8x128xf32>
    %298 = math.tanh %297 : vector<8x128xf32>
    %cst_100 = arith.constant 5.000000e-01 : f32
    %299 = vector.broadcast %cst_100 : f32 to vector<8x128xf32>
    %300 = arith.mulf %299, %298 : vector<8x128xf32>
    %cst_101 = arith.constant 5.000000e-01 : f32
    %301 = vector.broadcast %cst_101 : f32 to vector<8x128xf32>
    %302 = arith.addf %300, %301 : vector<8x128xf32>
    %303 = vector.extract_strided_slice %278 {offsets = [0, 384], sizes = [8, 128], strides = [1, 1]} : vector<8x512xf32> to vector<8x128xf32>
    %304 = math.tanh %303 : vector<8x128xf32>
    %305 = arith.mulf %286, %269 : vector<8x128xf32>
    %306 = arith.mulf %294, %304 : vector<8x128xf32>
    %307 = arith.addf %305, %306 : vector<8x128xf32>
    %308 = math.tanh %307 : vector<8x128xf32>
    %309 = arith.mulf %302, %308 : vector<8x128xf32>
    %c8_i32 = arith.constant 8 : i32
    %c0_102 = arith.constant 0 : index
    %c0_103 = arith.constant 0 : index
    %310 = vector.load %arg4[%c0_102, %c0_103] : memref<8x128xf32, #tpu.memory_space<vmem>>, vector<8x128xf32>
    tpu.vector_store %arg4[%c0_102, %c0_103], %309 {strides = array<i32>} : memref<8x128xf32, #tpu.memory_space<vmem>>, vector<8x128xf32>,
    %c0_104 = arith.constant 0 : index
    %c0_105 = arith.constant 0 : index
    %311 = vector.load %arg5[%c0_104, %c0_105] : memref<8x128xf32, #tpu.memory_space<vmem>>, vector<8x128xf32>
    tpu.vector_store %arg5[%c0_104, %c0_105], %307 {strides = array<i32>} : memref<8x128xf32, #tpu.memory_space<vmem>>, vector<8x128xf32>,
    return
  }
  func.func @transform_0(%arg0: i32, %arg1: i32) -> (i32, i32, i32) {
    %c0_i32 = arith.constant 0 : i32
    %c0_i32_0 = arith.constant 0 : i32
    return %arg1, %arg0, %c0_i32 : i32, i32, i32
  }
  func.func @transform_1(%arg0: i32, %arg1: i32) -> (i32, i32) {
    %c0_i32 = arith.constant 0 : i32
    %c0_i32_0 = arith.constant 0 : i32
    %c0_i32_1 = arith.constant 0 : i32
    return %c0_i32, %c0_i32_0 : i32, i32
  }
  func.func @transform_2(%arg0: i32, %arg1: i32) -> (i32, i32) {
    %c0_i32 = arith.constant 0 : i32
    %c0_i32_0 = arith.constant 0 : i32
    return %arg0, %c0_i32 : i32, i32
  }
}

</mosaic_0001>

<llo_original>
// kernel: tpu_custom_call.1
$region0: #{tpu_custom_call.1}
  #allocation0 [shape = 'u32[]', space=smem, size = 0x4, offset = 0x4, fixed_abs, tag = 'smem constant byte address 0x4 - core index']
  #allocation1 [shape = 'u32[72,128]{1,0:T(1,128)}', space=vmem, size = 0x9000, scoped, tag = 'internal scratch']
  #allocation2 [shape = 'f32[8,128]{1,0:T(8,128)}', space=vmem, size = 0x1000, scoped, tag = 'scratch operand']
  %s0 = inlined_call_operand.hbm [shape: bf16[8,8,512], index: 0, kind: input, shape index: {}]
  %s1 = inlined_call_operand.hbm [shape: bf16[128,512], index: 1, kind: input, shape index: {}]
  %s2 = inlined_call_operand.hbm [shape: f32[8,128], index: 2, kind: output, shape index: {}]
  %s3 = sld [smem:[#allocation0]]
  $region30: #{tpu_custom_call.1} parent=0
    _
  %s5 = ssub.s32 1, %s3
  %s6 = scalar_select 0, %s5, %s3
  $region1: #{tpu_custom_call.1} parent=0
    #allocation3 [shape = 'u8[65536]{0}', space=vmem, size = 0x10000, scoped, tag = 'input window, operand 0, single buffered']
    #allocation4 [shape = 's32[1]{0}', space=sflag, size = 0x4, scoped, tag = 'scoped memory for tpu_custom_call.1']
    #allocation5 [shape = 's32[1]{0}', space=sflag, size = 0x4, scoped, tag = 'scoped memory for tpu_custom_call.1']
    #allocation6 [shape = 'u8[131072]{0}', space=vmem, size = 0x20000, scoped, tag = 'input window, operand 1, single buffered']
    #allocation7 [shape = 's32[1]{0}', space=sflag, size = 0x4, scoped, tag = 'scoped memory for tpu_custom_call.1']
    #allocation8 [shape = 'u8[4096]{0}', space=vmem, size = 0x1000, scoped, tag = 'output window, operand 0, single buffered']
    %7 = vsyncpa [#allocation4], 0
    %8 = vsyncpa [#allocation7], 0
    %9 = vsyncpa [#allocation5], 0
    // Predicated region
    $region2: #{tpu_custom_call.1} parent=1 // pred_check
      _
    $region3: #{tpu_custom_call.1} parent=1 // pred_check_branch
      %11 = sbr.rel (0) target = $region5
    $region4: #{tpu_custom_call.1} parent=1 // pred_region
      %13 = vsyncadd [#allocation4], 0
      %s14 = sshll.u32 %s0, 4
      %s15 = int_to_ptr.hbm [resolvable:$true] %s14
      %s16 = sshll.u32 [#allocation3], 4
      %s17 = int_to_ptr.vmem [resolvable:$true] %s16
      %22 = dma.hbm_to_vmem [thread:$0]  %s15, 2048, %s17, [#allocation4], 256, 256, 16
    $region5: #{tpu_custom_call.1} parent=1 // pred_fallthru
      _
    // Predicated region
    $region6: #{tpu_custom_call.1} parent=1 // pred_check
      _
    $region7: #{tpu_custom_call.1} parent=1 // pred_check_branch
      %24 = sbr.rel (0) target = $region9
    $region8: #{tpu_custom_call.1} parent=1 // pred_region
      %26 = vsyncadd [#allocation7], 0
      %s27 = sshll.u32 %s1, 4
      %s28 = int_to_ptr.hbm [resolvable:$true] %s27
      %s29 = sshll.u32 [#allocation6], 4
      %s30 = int_to_ptr.vmem [resolvable:$true] %s29
      %35 = dma.hbm_to_vmem [thread:$0]  %s28, 4096, %s30, [#allocation7], 256, 256, 16
    $region9: #{tpu_custom_call.1} parent=1 // pred_fallthru
      _
    // Predicated region
    $region10: #{tpu_custom_call.1} parent=1 // pred_check
      _
    $region11: #{tpu_custom_call.1} parent=1 // pred_check_branch
      %37 = sbr.rel (0) target = $region13
    $region12: #{tpu_custom_call.1} parent=1 // pred_region
      %39 = dma.done [#allocation4], 2048
    $region13: #{tpu_custom_call.1} parent=1 // pred_fallthru
      _
    // Predicated region
    $region14: #{tpu_custom_call.1} parent=1 // pred_check
      _
    $region15: #{tpu_custom_call.1} parent=1 // pred_check_branch
      %41 = sbr.rel (0) target = $region17
    $region16: #{tpu_custom_call.1} parent=1 // pred_region
      %43 = dma.done [#allocation7], 4096
    $region17: #{tpu_custom_call.1} parent=1 // pred_fallthru
      _
    %p44 = scmp.eq.s32.totalorder 0, 0
    // Predicated region
    $region18: #{tpu_custom_call.1} parent=1 // pred_check
      %p45 = pneg %p44
    $region19: #{tpu_custom_call.1} parent=1 // pred_check_branch
      %47 = sbr.rel (%p45) target = $region21
    $region20: #{tpu_custom_call.1} parent=1 // pred_region
      %48 = vst [vmem:[#allocation8] sm:$0xff] 0.0
      %49 = vst [vmem:[#allocation2] sm:$0xff] 0.0
    $region21: #{tpu_custom_call.1} parent=1 // pred_fallthru
      _
    %v50 = vld [vmem:[#allocation6] sm:$0xff]
    %v51 = vld [vmem:[#allocation6 + $0x8] sm:$0xff]
    %v52 = vld [vmem:[#allocation6 + $0x10] sm:$0xff]
    %v53 = vld [vmem:[#allocation6 + $0x18] sm:$0xff]
    %v54 = vld [vmem:[#allocation6 + $0x20] sm:$0xff]
    %v55 = vld [vmem:[#allocation6 + $0x28] sm:$0xff]
    %v56 = vld [vmem:[#allocation6 + $0x30] sm:$0xff]
    %v57 = vld [vmem:[#allocation6 + $0x38] sm:$0xff]
    %v58 = vld [vmem:[#allocation6 + $0x40] sm:$0xff]
    %v59 = vld [vmem:[#allocation6 + $0x48] sm:$0xff]
    %v60 = vld [vmem:[#allocation6 + $0x50] sm:$0xff]
    %v61 = vld [vmem:[#allocation6 + $0x58] sm:$0xff]
    %v62 = vld [vmem:[#allocation6 + $0x60] sm:$0xff]
    %v63 = vld [vmem:[#allocation6 + $0x68] sm:$0xff]
    %v64 = vld [vmem:[#allocation6 + $0x70] sm:$0xff]
    %v65 = vld [vmem:[#allocation6 + $0x78] sm:$0xff]
    %v66 = vld [vmem:[#allocation6 + $0x80] sm:$0xff]
    %v67 = vld [vmem:[#allocation6 + $0x88] sm:$0xff]
    %v68 = vld [vmem:[#allocation6 + $0x90] sm:$0xff]
    %v69 = vld [vmem:[#allocation6 + $0x98] sm:$0xff]
    %v70 = vld [vmem:[#allocation6 + $0xa0] sm:$0xff]
    %v71 = vld [vmem:[#allocation6 + $0xa8] sm:$0xff]
    %v72 = vld [vmem:[#allocation6 + $0xb0] sm:$0xff]
    %v73 = vld [vmem:[#allocation6 + $0xb8] sm:$0xff]
    %v74 = vld [vmem:[#allocation6 + $0xc0] sm:$0xff]
    %v75 = vld [vmem:[#allocation6 + $0xc8] sm:$0xff]
    %v76 = vld [vmem:[#allocation6 + $0xd0] sm:$0xff]
    %v77 = vld [vmem:[#allocation6 + $0xd8] sm:$0xff]
    %v78 = vld [vmem:[#allocation6 + $0xe0] sm:$0xff]
    %v79 = vld [vmem:[#allocation6 + $0xe8] sm:$0xff]
    %v80 = vld [vmem:[#allocation6 + $0xf0] sm:$0xff]
    %v81 = vld [vmem:[#allocation6 + $0xf8] sm:$0xff]
    %v82 = vld [vmem:[#allocation8] sm:$0xff]
    %v83 = vld [vmem:[#allocation2] sm:$0xff]
    %v84 = vld [vmem:[#allocation3] sm:$0xff]
    %v85 = vld [vmem:[#allocation3 + $0x8] sm:$0xff]
    %v86 = vunpack.c.l.bf16 %v84
    %v87 = vunpack.c.h.bf16 %v84
    %v88 = vunpack.c.l.bf16 %v85
    %v89 = vunpack.c.h.bf16 %v85
    %v90 = vpack.c.bf16 %v82, %v82
    %v123 = vunpack.c.l.b16 %v50
    %v124 = vunpack.c.h.b16 %v50
    %v125 = vunpack.c.l.b16 %v51
    %v126 = vunpack.c.h.b16 %v51
    %v127 = vunpack.c.l.b16 %v52
    %v128 = vunpack.c.h.b16 %v52
    %v129 = vunpack.c.l.b16 %v53
    %v130 = vunpack.c.h.b16 %v53
    %v131 = vunpack.c.l.b16 %v54
    %v132 = vunpack.c.h.b16 %v54
    %v133 = vunpack.c.l.b16 %v55
    %v134 = vunpack.c.h.b16 %v55
    %v135 = vunpack.c.l.b16 %v56
    %v136 = vunpack.c.h.b16 %v56
    %v137 = vunpack.c.l.b16 %v57
    %v138 = vunpack.c.h.b16 %v57
    %v139 = vunpack.c.l.b16 %v58
    %v140 = vunpack.c.h.b16 %v58
    %v141 = vunpack.c.l.b16 %v59
    %v142 = vunpack.c.h.b16 %v59
    %v143 = vunpack.c.l.b16 %v60
    %v144 = vunpack.c.h.b16 %v60
    %v145 = vunpack.c.l.b16 %v61
    %v146 = vunpack.c.h.b16 %v61
    %v147 = vunpack.c.l.b16 %v62
    %v148 = vunpack.c.h.b16 %v62
    %v149 = vunpack.c.l.b16 %v63
    %v150 = vunpack.c.h.b16 %v63
    %v151 = vunpack.c.l.b16 %v64
    %v152 = vunpack.c.h.b16 %v64
    %v153 = vunpack.c.l.b16 %v65
    %v154 = vunpack.c.h.b16 %v65
    %v155 = vunpack.c.l.b16 %v66
    %v156 = vunpack.c.h.b16 %v66
    %v157 = vunpack.c.l.b16 %v67
    %v158 = vunpack.c.h.b16 %v67
    %v159 = vunpack.c.l.b16 %v68
    %v160 = vunpack.c.h.b16 %v68
    %v161 = vunpack.c.l.b16 %v69
    %v162 = vunpack.c.h.b16 %v69
    %v163 = vunpack.c.l.b16 %v70
    %v164 = vunpack.c.h.b16 %v70
    %v165 = vunpack.c.l.b16 %v71
    %v166 = vunpack.c.h.b16 %v71
    %v167 = vunpack.c.l.b16 %v72
    %v168 = vunpack.c.h.b16 %v72
    %v169 = vunpack.c.l.b16 %v73
    %v170 = vunpack.c.h.b16 %v73
    %v171 = vunpack.c.l.b16 %v74
    %v172 = vunpack.c.h.b16 %v74
    %v173 = vunpack.c.l.b16 %v75
    %v174 = vunpack.c.h.b16 %v75
    %v175 = vunpack.c.l.b16 %v76
    %v176 = vunpack.c.h.b16 %v76
    %v177 = vunpack.c.l.b16 %v77
    %v178 = vunpack.c.h.b16 %v77
    %v179 = vunpack.c.l.b16 %v78
    %v180 = vunpack.c.h.b16 %v78
    %v181 = vunpack.c.l.b16 %v79
    %v182 = vunpack.c.h.b16 %v79
    %v183 = vunpack.c.l.b16 %v80
    %v184 = vunpack.c.h.b16 %v80
    %v185 = vunpack.c.l.b16 %v81
    %v186 = vunpack.c.h.b16 %v81
    %v187 = vpack.c.b16 %v127, %v123
    %v188 = vpack.c.b16 %v128, %v124
    %v189 = vpack.c.b16 %v129, %v125
    %v190 = vpack.c.b16 %v130, %v126
    %v191 = vpack.c.b16 %v135, %v131
    %v192 = vpack.c.b16 %v136, %v132
    %v193 = vpack.c.b16 %v137, %v133
    %v194 = vpack.c.b16 %v138, %v134
    %v195 = vpack.c.b16 %v143, %v139
    %v196 = vpack.c.b16 %v144, %v140
    %v197 = vpack.c.b16 %v145, %v141
    %v198 = vpack.c.b16 %v146, %v142
    %v199 = vpack.c.b16 %v151, %v147
    %v200 = vpack.c.b16 %v152, %v148
    %v201 = vpack.c.b16 %v153, %v149
    %v202 = vpack.c.b16 %v154, %v150
    %v203 = vpack.c.b16 %v159, %v155
    %v204 = vpack.c.b16 %v160, %v156
    %v205 = vpack.c.b16 %v161, %v157
    %v206 = vpack.c.b16 %v162, %v158
    %v207 = vpack.c.b16 %v167, %v163
    %v208 = vpack.c.b16 %v168, %v164
    %v209 = vpack.c.b16 %v169, %v165
    %v210 = vpack.c.b16 %v170, %v166
    %v211 = vpack.c.b16 %v175, %v171
    %v212 = vpack.c.b16 %v176, %v172
    %v213 = vpack.c.b16 %v177, %v173
    %v214 = vpack.c.b16 %v178, %v174
    %v215 = vpack.c.b16 %v183, %v179
    %v216 = vpack.c.b16 %v184, %v180
    %v217 = vpack.c.b16 %v185, %v181
    %v218 = vpack.c.b16 %v186, %v182
    %251 = vmatpush.bf16.msra.mxu0 %v215
    %252 = vmatpush.bf16.msra.mxu0 %v211
    %253 = vmatpush.bf16.msra.mxu0 %v207
    %254 = vmatpush.bf16.msra.mxu0 %v203
    %255 = vmatpush.bf16.msra.mxu0 %v199
    %256 = vmatpush.bf16.msra.mxu0 %v195
    %257 = vmatpush.bf16.msra.mxu0 %v191
    %258 = vmatpush.bf16.msra.mxu0 %v187
    %259 = vmatmul.bf16.gmra.mxu0 %v90
    %v260 = vpop.f32.mrf.mxu0
    %v261 = vadd.f32 0.0, %v260
    %v262 = vpop.f32.mrf.mxu0
    %263 = vdwg.mxu0
    %264 = vmatpush.bf16.msra.mxu0 %v216
    %265 = vmatpush.bf16.msra.mxu0 %v212
    %266 = vmatpush.bf16.msra.mxu0 %v208
    %267 = vmatpush.bf16.msra.mxu0 %v204
    %268 = vmatpush.bf16.msra.mxu0 %v200
    %269 = vmatpush.bf16.msra.mxu0 %v196
    %270 = vmatpush.bf16.msra.mxu0 %v192
    %271 = vmatpush.bf16.msra.mxu0 %v188
    %272 = vmatmul.bf16.gmra.mxu0 %v90
    %v273 = vpop.f32.mrf.mxu0
    %v274 = vadd.f32 0.0, %v273
    %v275 = vpop.f32.mrf.mxu0
    %276 = vdwg.mxu0
    %277 = vmatpush.bf16.msra.mxu0 %v217
    %278 = vmatpush.bf16.msra.mxu0 %v213
    %279 = vmatpush.bf16.msra.mxu0 %v209
    %280 = vmatpush.bf16.msra.mxu0 %v205
    %281 = vmatpush.bf16.msra.mxu0 %v201
    %282 = vmatpush.bf16.msra.mxu0 %v197
    %283 = vmatpush.bf16.msra.mxu0 %v193
    %284 = vmatpush.bf16.msra.mxu0 %v189
    %285 = vmatmul.bf16.gmra.mxu0 %v90
    %v286 = vpop.f32.mrf.mxu0
    %v287 = vadd.f32 0.0, %v286
    %v288 = vpop.f32.mrf.mxu0
    %289 = vdwg.mxu0
    %290 = vmatpush.bf16.msra.mxu0 %v218
    %291 = vmatpush.bf16.msra.mxu0 %v214
    %292 = vmatpush.bf16.msra.mxu0 %v210
    %293 = vmatpush.bf16.msra.mxu0 %v206
    %294 = vmatpush.bf16.msra.mxu0 %v202
    %295 = vmatpush.bf16.msra.mxu0 %v198
    %296 = vmatpush.bf16.msra.mxu0 %v194
    %297 = vmatpush.bf16.msra.mxu0 %v190
    %298 = vmatmul.bf16.gmra.mxu0 %v90
    %v299 = vpop.f32.mrf.mxu0
    %v300 = vadd.f32 0.0, %v299
    %v301 = vpop.f32.mrf.mxu0
    %302 = vdwg.mxu0
    %v303 = vadd.f32 %v86, %v261
    %v304 = vadd.f32 %v87, %v274
    %v305 = vadd.f32 %v88, %v287
    %v306 = vadd.f32 %v89, %v300
    %v307 = vmul.f32 %v303, 0.5
    %v308 = vtanh.pop %v307
    %v309 = vmul.f32 %v308, 0.5
    %v310 = vadd.f32 %v309, 0.5
    %v311 = vmul.f32 %v304, 0.5
    %v312 = vtanh.pop %v311
    %v313 = vmul.f32 %v312, 0.5
    %v314 = vadd.f32 %v313, 0.5
    %v315 = vmul.f32 %v305, 0.5
    %v316 = vtanh.pop %v315
    %v317 = vmul.f32 %v316, 0.5
    %v318 = vadd.f32 %v317, 0.5
    %v319 = vtanh.pop %v306
    %v320 = vmul.f32 %v310, %v83
    %v321 = vmul.f32 %v314, %v319
    %v322 = vadd.f32 %v320, %v321
    %v323 = vtanh.pop %v322
    %v324 = vmul.f32 %v318, %v323
    %s325 = scalar_lea.vmem [#allocation3], 16
    %v326 = vld [vmem:[%s325] sm:$0xff]
    %v327 = vld [vmem:[%s325 + $0x8] sm:$0xff]
    %v328 = vunpack.c.l.bf16 %v326
    %v329 = vunpack.c.h.bf16 %v326
    %v330 = vunpack.c.l.bf16 %v327
    %v331 = vunpack.c.h.bf16 %v327
    %v332 = vpack.c.bf16 %v324, %v324
    %333 = vmatpush.bf16.msra.mxu0 %v215
    %334 = vmatpush.bf16.msra.mxu0 %v211
    %335 = vmatpush.bf16.msra.mxu0 %v207
    %336 = vmatpush.bf16.msra.mxu0 %v203
    %337 = vmatpush.bf16.msra.mxu0 %v199
    %338 = vmatpush.bf16.msra.mxu0 %v195
    %339 = vmatpush.bf16.msra.mxu0 %v191
    %340 = vmatpush.bf16.msra.mxu0 %v187
    %341 = vmatmul.bf16.gmra.mxu0 %v332
    %v342 = vpop.f32.mrf.mxu0
    %v343 = vadd.f32 0.0, %v342
    %v344 = vpop.f32.mrf.mxu0
    %345 = vdwg.mxu0
    %346 = vmatpush.bf16.msra.mxu0 %v216
    %347 = vmatpush.bf16.msra.mxu0 %v212
    %348 = vmatpush.bf16.msra.mxu0 %v208
    %349 = vmatpush.bf16.msra.mxu0 %v204
    %350 = vmatpush.bf16.msra.mxu0 %v200
    %351 = vmatpush.bf16.msra.mxu0 %v196
    %352 = vmatpush.bf16.msra.mxu0 %v192
    %353 = vmatpush.bf16.msra.mxu0 %v188
    %354 = vmatmul.bf16.gmra.mxu0 %v332
    %v355 = vpop.f32.mrf.mxu0
    %v356 = vadd.f32 0.0, %v355
    %v357 = vpop.f32.mrf.mxu0
    %358 = vdwg.mxu0
    %359 = vmatpush.bf16.msra.mxu0 %v217
    %360 = vmatpush.bf16.msra.mxu0 %v213
    %361 = vmatpush.bf16.msra.mxu0 %v209
    %362 = vmatpush.bf16.msra.mxu0 %v205
    %363 = vmatpush.bf16.msra.mxu0 %v201
    %364 = vmatpush.bf16.msra.mxu0 %v197
    %365 = vmatpush.bf16.msra.mxu0 %v193
    %366 = vmatpush.bf16.msra.mxu0 %v189
    %367 = vmatmul.bf16.gmra.mxu0 %v332
    %v368 = vpop.f32.mrf.mxu0
    %v369 = vadd.f32 0.0, %v368
    %v370 = vpop.f32.mrf.mxu0
    %371 = vdwg.mxu0
    %372 = vmatpush.bf16.msra.mxu0 %v218
    %373 = vmatpush.bf16.msra.mxu0 %v214
    %374 = vmatpush.bf16.msra.mxu0 %v210
    %375 = vmatpush.bf16.msra.mxu0 %v206
    %376 = vmatpush.bf16.msra.mxu0 %v202
    %377 = vmatpush.bf16.msra.mxu0 %v198
    %378 = vmatpush.bf16.msra.mxu0 %v194
    %379 = vmatpush.bf16.msra.mxu0 %v190
    %380 = vmatmul.bf16.gmra.mxu0 %v332
    %v381 = vpop.f32.mrf.mxu0
    %v382 = vadd.f32 0.0, %v381
    %v383 = vpop.f32.mrf.mxu0
    %384 = vdwg.mxu0
    %v385 = vadd.f32 %v328, %v343
    %v386 = vadd.f32 %v329, %v356
    %v387 = vadd.f32 %v330, %v369
    %v388 = vadd.f32 %v331, %v382
    %v389 = vmul.f32 %v385, 0.5
    %v390 = vtanh.pop %v389
    %v391 = vmul.f32 %v390, 0.5
    %v392 = vadd.f32 %v391, 0.5
    %v393 = vmul.f32 %v386, 0.5
    %v394 = vtanh.pop %v393
    %v395 = vmul.f32 %v394, 0.5
    %v396 = vadd.f32 %v395, 0.5
    %v397 = vmul.f32 %v387, 0.5
    %v398 = vtanh.pop %v397
    %v399 = vmul.f32 %v398, 0.5
    %v400 = vadd.f32 %v399, 0.5
    %v401 = vtanh.pop %v388
    %v402 = vmul.f32 %v392, %v322
    %v403 = vmul.f32 %v396, %v401
    %v404 = vadd.f32 %v402, %v403
    %v405 = vtanh.pop %v404
    %v406 = vmul.f32 %v400, %v405
    %s407 = scalar_lea.vmem [#allocation3], 32
    %v408 = vld [vmem:[%s407] sm:$0xff]
    %v409 = vld [vmem:[%s407 + $0x8] sm:$0xff]
    %v410 = vunpack.c.l.bf16 %v408
    %v411 = vunpack.c.h.bf16 %v408
    %v412 = vunpack.c.l.bf16 %v409
    %v413 = vunpack.c.h.bf16 %v409
    %v414 = vpack.c.bf16 %v406, %v406
    %415 = vmatpush.bf16.msra.mxu0 %v215
    %416 = vmatpush.bf16.msra.mxu0 %v211
    %417 = vmatpush.bf16.msra.mxu0 %v207
    %418 = vmatpush.bf16.msra.mxu0 %v203
    %419 = vmatpush.bf16.msra.mxu0 %v199
    %420 = vmatpush.bf16.msra.mxu0 %v195
    %421 = vmatpush.bf16.msra.mxu0 %v191
    %422 = vmatpush.bf16.msra.mxu0 %v187
    %423 = vmatmul.bf16.gmra.mxu0 %v414
    %v424 = vpop.f32.mrf.mxu0
    %v425 = vadd.f32 0.0, %v424
    %v426 = vpop.f32.mrf.mxu0
    %427 = vdwg.mxu0
    %428 = vmatpush.bf16.msra.mxu0 %v216
    %429 = vmatpush.bf16.msra.mxu0 %v212
    %430 = vmatpush.bf16.msra.mxu0 %v208
    %431 = vmatpush.bf16.msra.mxu0 %v204
    %432 = vmatpush.bf16.msra.mxu0 %v200
    %433 = vmatpush.bf16.msra.mxu0 %v196
    %434 = vmatpush.bf16.msra.mxu0 %v192
    %435 = vmatpush.bf16.msra.mxu0 %v188
    %436 = vmatmul.bf16.gmra.mxu0 %v414
    %v437 = vpop.f32.mrf.mxu0
    %v438 = vadd.f32 0.0, %v437
    %v439 = vpop.f32.mrf.mxu0
    %440 = vdwg.mxu0
    %441 = vmatpush.bf16.msra.mxu0 %v217
    %442 = vmatpush.bf16.msra.mxu0 %v213
    %443 = vmatpush.bf16.msra.mxu0 %v209
    %444 = vmatpush.bf16.msra.mxu0 %v205
    %445 = vmatpush.bf16.msra.mxu0 %v201
    %446 = vmatpush.bf16.msra.mxu0 %v197
    %447 = vmatpush.bf16.msra.mxu0 %v193
    %448 = vmatpush.bf16.msra.mxu0 %v189
    %449 = vmatmul.bf16.gmra.mxu0 %v414
    %v450 = vpop.f32.mrf.mxu0
    %v451 = vadd.f32 0.0, %v450
    %v452 = vpop.f32.mrf.mxu0
    %453 = vdwg.mxu0
    %454 = vmatpush.bf16.msra.mxu0 %v218
    %455 = vmatpush.bf16.msra.mxu0 %v214
    %456 = vmatpush.bf16.msra.mxu0 %v210
    %457 = vmatpush.bf16.msra.mxu0 %v206
    %458 = vmatpush.bf16.msra.mxu0 %v202
    %459 = vmatpush.bf16.msra.mxu0 %v198
    %460 = vmatpush.bf16.msra.mxu0 %v194
    %461 = vmatpush.bf16.msra.mxu0 %v190
    %462 = vmatmul.bf16.gmra.mxu0 %v414
    %v463 = vpop.f32.mrf.mxu0
    %v464 = vadd.f32 0.0, %v463
    %v465 = vpop.f32.mrf.mxu0
    %466 = vdwg.mxu0
    %v467 = vadd.f32 %v410, %v425
    %v468 = vadd.f32 %v411, %v438
    %v469 = vadd.f32 %v412, %v451
    %v470 = vadd.f32 %v413, %v464
    %v471 = vmul.f32 %v467, 0.5
    %v472 = vtanh.pop %v471
    %v473 = vmul.f32 %v472, 0.5
    %v474 = vadd.f32 %v473, 0.5
    %v475 = vmul.f32 %v468, 0.5
    %v476 = vtanh.pop %v475
    %v477 = vmul.f32 %v476, 0.5
    %v478 = vadd.f32 %v477, 0.5
    %v479 = vmul.f32 %v469, 0.5
    %v480 = vtanh.pop %v479
    %v481 = vmul.f32 %v480, 0.5
    %v482 = vadd.f32 %v481, 0.5
    %v483 = vtanh.pop %v470
    %v484 = vmul.f32 %v474, %v404
    %v485 = vmul.f32 %v478, %v483
    %v486 = vadd.f32 %v484, %v485
    %v487 = vtanh.pop %v486
    %v488 = vmul.f32 %v482, %v487
    %s489 = scalar_lea.vmem [#allocation3], 48
    %v490 = vld [vmem:[%s489] sm:$0xff]
    %v491 = vld [vmem:[%s489 + $0x8] sm:$0xff]
    %v492 = vunpack.c.l.bf16 %v490
    %v493 = vunpack.c.h.bf16 %v490
    %v494 = vunpack.c.l.bf16 %v491
    %v495 = vunpack.c.h.bf16 %v491
    %v496 = vpack.c.bf16 %v488, %v488
    %497 = vmatpush.bf16.msra.mxu0 %v215
    %498 = vmatpush.bf16.msra.mxu0 %v211
    %499 = vmatpush.bf16.msra.mxu0 %v207
    %500 = vmatpush.bf16.msra.mxu0 %v203
    %501 = vmatpush.bf16.msra.mxu0 %v199
    %502 = vmatpush.bf16.msra.mxu0 %v195
    %503 = vmatpush.bf16.msra.mxu0 %v191
    %504 = vmatpush.bf16.msra.mxu0 %v187
    %505 = vmatmul.bf16.gmra.mxu0 %v496
    %v506 = vpop.f32.mrf.mxu0
    %v507 = vadd.f32 0.0, %v506
    %v508 = vpop.f32.mrf.mxu0
    %509 = vdwg.mxu0
    %510 = vmatpush.bf16.msra.mxu0 %v216
    %511 = vmatpush.bf16.msra.mxu0 %v212
    %512 = vmatpush.bf16.msra.mxu0 %v208
    %513 = vmatpush.bf16.msra.mxu0 %v204
    %514 = vmatpush.bf16.msra.mxu0 %v200
    %515 = vmatpush.bf16.msra.mxu0 %v196
    %516 = vmatpush.bf16.msra.mxu0 %v192
    %517 = vmatpush.bf16.msra.mxu0 %v188
    %518 = vmatmul.bf16.gmra.mxu0 %v496
    %v519 = vpop.f32.mrf.mxu0
    %v520 = vadd.f32 0.0, %v519
    %v521 = vpop.f32.mrf.mxu0
    %522 = vdwg.mxu0
    %523 = vmatpush.bf16.msra.mxu0 %v217
    %524 = vmatpush.bf16.msra.mxu0 %v213
    %525 = vmatpush.bf16.msra.mxu0 %v209
    %526 = vmatpush.bf16.msra.mxu0 %v205
    %527 = vmatpush.bf16.msra.mxu0 %v201
    %528 = vmatpush.bf16.msra.mxu0 %v197
    %529 = vmatpush.bf16.msra.mxu0 %v193
    %530 = vmatpush.bf16.msra.mxu0 %v189
    %531 = vmatmul.bf16.gmra.mxu0 %v496
    %v532 = vpop.f32.mrf.mxu0
    %v533 = vadd.f32 0.0, %v532
    %v534 = vpop.f32.mrf.mxu0
    %535 = vdwg.mxu0
    %536 = vmatpush.bf16.msra.mxu0 %v218
    %537 = vmatpush.bf16.msra.mxu0 %v214
    %538 = vmatpush.bf16.msra.mxu0 %v210
    %539 = vmatpush.bf16.msra.mxu0 %v206
    %540 = vmatpush.bf16.msra.mxu0 %v202
    %541 = vmatpush.bf16.msra.mxu0 %v198
    %542 = vmatpush.bf16.msra.mxu0 %v194
    %543 = vmatpush.bf16.msra.mxu0 %v190
    %544 = vmatmul.bf16.gmra.mxu0 %v496
    %v545 = vpop.f32.mrf.mxu0
    %v546 = vadd.f32 0.0, %v545
    %v547 = vpop.f32.mrf.mxu0
    %548 = vdwg.mxu0
    %v549 = vadd.f32 %v492, %v507
    %v550 = vadd.f32 %v493, %v520
    %v551 = vadd.f32 %v494, %v533
    %v552 = vadd.f32 %v495, %v546
    %v553 = vmul.f32 %v549, 0.5
    %v554 = vtanh.pop %v553
    %v555 = vmul.f32 %v554, 0.5
    %v556 = vadd.f32 %v555, 0.5
    %v557 = vmul.f32 %v550, 0.5
    %v558 = vtanh.pop %v557
    %v559 = vmul.f32 %v558, 0.5
    %v560 = vadd.f32 %v559, 0.5
    %v561 = vmul.f32 %v551, 0.5
    %v562 = vtanh.pop %v561
    %v563 = vmul.f32 %v562, 0.5
    %v564 = vadd.f32 %v563, 0.5
    %v565 = vtanh.pop %v552
    %v566 = vmul.f32 %v556, %v486
    %v567 = vmul.f32 %v560, %v565
    %v568 = vadd.f32 %v566, %v567
    %v569 = vtanh.pop %v568
    %v570 = vmul.f32 %v564, %v569
    %s571 = scalar_lea.vmem [#allocation3], 64
    %v572 = vld [vmem:[%s571] sm:$0xff]
    %v573 = vld [vmem:[%s571 + $0x8] sm:$0xff]
    %v574 = vunpack.c.l.bf16 %v572
    %v575 = vunpack.c.h.bf16 %v572
    %v576 = vunpack.c.l.bf16 %v573
    %v577 = vunpack.c.h.bf16 %v573
    %v578 = vpack.c.bf16 %v570, %v570
    %579 = vmatpush.bf16.msra.mxu0 %v215
    %580 = vmatpush.bf16.msra.mxu0 %v211
    %581 = vmatpush.bf16.msra.mxu0 %v207
    %582 = vmatpush.bf16.msra.mxu0 %v203
    %583 = vmatpush.bf16.msra.mxu0 %v199
    %584 = vmatpush.bf16.msra.mxu0 %v195
    %585 = vmatpush.bf16.msra.mxu0 %v191
    %586 = vmatpush.bf16.msra.mxu0 %v187
    %587 = vmatmul.bf16.gmra.mxu0 %v578
    %v588 = vpop.f32.mrf.mxu0
    %v589 = vadd.f32 0.0, %v588
    %v590 = vpop.f32.mrf.mxu0
    %591 = vdwg.mxu0
    %592 = vmatpush.bf16.msra.mxu0 %v216
    %593 = vmatpush.bf16.msra.mxu0 %v212
    %594 = vmatpush.bf16.msra.mxu0 %v208
    %595 = vmatpush.bf16.msra.mxu0 %v204
    %596 = vmatpush.bf16.msra.mxu0 %v200
    %597 = vmatpush.bf16.msra.mxu0 %v196
    %598 = vmatpush.bf16.msra.mxu0 %v192
    %599 = vmatpush.bf16.msra.mxu0 %v188
    %600 = vmatmul.bf16.gmra.mxu0 %v578
    %v601 = vpop.f32.mrf.mxu0
    %v602 = vadd.f32 0.0, %v601
    %v603 = vpop.f32.mrf.mxu0
    %604 = vdwg.mxu0
    %605 = vmatpush.bf16.msra.mxu0 %v217
    %606 = vmatpush.bf16.msra.mxu0 %v213
    %607 = vmatpush.bf16.msra.mxu0 %v209
    %608 = vmatpush.bf16.msra.mxu0 %v205
    %609 = vmatpush.bf16.msra.mxu0 %v201
    %610 = vmatpush.bf16.msra.mxu0 %v197
    %611 = vmatpush.bf16.msra.mxu0 %v193
    %612 = vmatpush.bf16.msra.mxu0 %v189
    %613 = vmatmul.bf16.gmra.mxu0 %v578
    %v614 = vpop.f32.mrf.mxu0
    %v615 = vadd.f32 0.0, %v614
    %v616 = vpop.f32.mrf.mxu0
    %617 = vdwg.mxu0
    %618 = vmatpush.bf16.msra.mxu0 %v218
    %619 = vmatpush.bf16.msra.mxu0 %v214
    %620 = vmatpush.bf16.msra.mxu0 %v210
    %621 = vmatpush.bf16.msra.mxu0 %v206
    %622 = vmatpush.bf16.msra.mxu0 %v202
    %623 = vmatpush.bf16.msra.mxu0 %v198
    %624 = vmatpush.bf16.msra.mxu0 %v194
    %625 = vmatpush.bf16.msra.mxu0 %v190
    %626 = vmatmul.bf16.gmra.mxu0 %v578
    %v627 = vpop.f32.mrf.mxu0
    %v628 = vadd.f32 0.0, %v627
    %v629 = vpop.f32.mrf.mxu0
    %630 = vdwg.mxu0
    %v631 = vadd.f32 %v574, %v589
    %v632 = vadd.f32 %v575, %v602
    %v633 = vadd.f32 %v576, %v615
    %v634 = vadd.f32 %v577, %v628
    %v635 = vmul.f32 %v631, 0.5
    %v636 = vtanh.pop %v635
    %v637 = vmul.f32 %v636, 0.5
    %v638 = vadd.f32 %v637, 0.5
    %v639 = vmul.f32 %v632, 0.5
    %v640 = vtanh.pop %v639
    %v641 = vmul.f32 %v640, 0.5
    %v642 = vadd.f32 %v641, 0.5
    %v643 = vmul.f32 %v633, 0.5
    %v644 = vtanh.pop %v643
    %v645 = vmul.f32 %v644, 0.5
    %v646 = vadd.f32 %v645, 0.5
    %v647 = vtanh.pop %v634
    %v648 = vmul.f32 %v638, %v568
    %v649 = vmul.f32 %v642, %v647
    %v650 = vadd.f32 %v648, %v649
    %v651 = vtanh.pop %v650
    %v652 = vmul.f32 %v646, %v651
    %s653 = scalar_lea.vmem [#allocation3], 80
    %v654 = vld [vmem:[%s653] sm:$0xff]
    %v655 = vld [vmem:[%s653 + $0x8] sm:$0xff]
    %v656 = vunpack.c.l.bf16 %v654
    %v657 = vunpack.c.h.bf16 %v654
    %v658 = vunpack.c.l.bf16 %v655
    %v659 = vunpack.c.h.bf16 %v655
    %v660 = vpack.c.bf16 %v652, %v652
    %661 = vmatpush.bf16.msra.mxu0 %v215
    %662 = vmatpush.bf16.msra.mxu0 %v211
    %663 = vmatpush.bf16.msra.mxu0 %v207
    %664 = vmatpush.bf16.msra.mxu0 %v203
    %665 = vmatpush.bf16.msra.mxu0 %v199
    %666 = vmatpush.bf16.msra.mxu0 %v195
    %667 = vmatpush.bf16.msra.mxu0 %v191
    %668 = vmatpush.bf16.msra.mxu0 %v187
    %669 = vmatmul.bf16.gmra.mxu0 %v660
    %v670 = vpop.f32.mrf.mxu0
    %v671 = vadd.f32 0.0, %v670
    %v672 = vpop.f32.mrf.mxu0
    %673 = vdwg.mxu0
    %674 = vmatpush.bf16.msra.mxu0 %v216
    %675 = vmatpush.bf16.msra.mxu0 %v212
    %676 = vmatpush.bf16.msra.mxu0 %v208
    %677 = vmatpush.bf16.msra.mxu0 %v204
    %678 = vmatpush.bf16.msra.mxu0 %v200
    %679 = vmatpush.bf16.msra.mxu0 %v196
    %680 = vmatpush.bf16.msra.mxu0 %v192
    %681 = vmatpush.bf16.msra.mxu0 %v188
    %682 = vmatmul.bf16.gmra.mxu0 %v660
    %v683 = vpop.f32.mrf.mxu0
    %v684 = vadd.f32 0.0, %v683
    %v685 = vpop.f32.mrf.mxu0
    %686 = vdwg.mxu0
    %687 = vmatpush.bf16.msra.mxu0 %v217
    %688 = vmatpush.bf16.msra.mxu0 %v213
    %689 = vmatpush.bf16.msra.mxu0 %v209
    %690 = vmatpush.bf16.msra.mxu0 %v205
    %691 = vmatpush.bf16.msra.mxu0 %v201
    %692 = vmatpush.bf16.msra.mxu0 %v197
    %693 = vmatpush.bf16.msra.mxu0 %v193
    %694 = vmatpush.bf16.msra.mxu0 %v189
    %695 = vmatmul.bf16.gmra.mxu0 %v660
    %v696 = vpop.f32.mrf.mxu0
    %v697 = vadd.f32 0.0, %v696
    %v698 = vpop.f32.mrf.mxu0
    %699 = vdwg.mxu0
    %700 = vmatpush.bf16.msra.mxu0 %v218
    %701 = vmatpush.bf16.msra.mxu0 %v214
    %702 = vmatpush.bf16.msra.mxu0 %v210
    %703 = vmatpush.bf16.msra.mxu0 %v206
    %704 = vmatpush.bf16.msra.mxu0 %v202
    %705 = vmatpush.bf16.msra.mxu0 %v198
    %706 = vmatpush.bf16.msra.mxu0 %v194
    %707 = vmatpush.bf16.msra.mxu0 %v190
    %708 = vmatmul.bf16.gmra.mxu0 %v660
    %v709 = vpop.f32.mrf.mxu0
    %v710 = vadd.f32 0.0, %v709
    %v711 = vpop.f32.mrf.mxu0
    %712 = vdwg.mxu0
    %v713 = vadd.f32 %v656, %v671
    %v714 = vadd.f32 %v657, %v684
    %v715 = vadd.f32 %v658, %v697
    %v716 = vadd.f32 %v659, %v710
    %v717 = vmul.f32 %v713, 0.5
    %v718 = vtanh.pop %v717
    %v719 = vmul.f32 %v718, 0.5
    %v720 = vadd.f32 %v719, 0.5
    %v721 = vmul.f32 %v714, 0.5
    %v722 = vtanh.pop %v721
    %v723 = vmul.f32 %v722, 0.5
    %v724 = vadd.f32 %v723, 0.5
    %v725 = vmul.f32 %v715, 0.5
    %v726 = vtanh.pop %v725
    %v727 = vmul.f32 %v726, 0.5
    %v728 = vadd.f32 %v727, 0.5
    %v729 = vtanh.pop %v716
    %v730 = vmul.f32 %v720, %v650
    %v731 = vmul.f32 %v724, %v729
    %v732 = vadd.f32 %v730, %v731
    %v733 = vtanh.pop %v732
    %v734 = vmul.f32 %v728, %v733
    %s735 = scalar_lea.vmem [#allocation3], 96
    %v736 = vld [vmem:[%s735] sm:$0xff]
    %v737 = vld [vmem:[%s735 + $0x8] sm:$0xff]
    %v738 = vunpack.c.l.bf16 %v736
    %v739 = vunpack.c.h.bf16 %v736
    %v740 = vunpack.c.l.bf16 %v737
    %v741 = vunpack.c.h.bf16 %v737
    %v742 = vpack.c.bf16 %v734, %v734
    %743 = vmatpush.bf16.msra.mxu0 %v215
    %744 = vmatpush.bf16.msra.mxu0 %v211
    %745 = vmatpush.bf16.msra.mxu0 %v207
    %746 = vmatpush.bf16.msra.mxu0 %v203
    %747 = vmatpush.bf16.msra.mxu0 %v199
    %748 = vmatpush.bf16.msra.mxu0 %v195
    %749 = vmatpush.bf16.msra.mxu0 %v191
    %750 = vmatpush.bf16.msra.mxu0 %v187
    %751 = vmatmul.bf16.gmra.mxu0 %v742
    %v752 = vpop.f32.mrf.mxu0
    %v753 = vadd.f32 0.0, %v752
    %v754 = vpop.f32.mrf.mxu0
    %755 = vdwg.mxu0
    %756 = vmatpush.bf16.msra.mxu0 %v216
    %757 = vmatpush.bf16.msra.mxu0 %v212
    %758 = vmatpush.bf16.msra.mxu0 %v208
    %759 = vmatpush.bf16.msra.mxu0 %v204
    %760 = vmatpush.bf16.msra.mxu0 %v200
    %761 = vmatpush.bf16.msra.mxu0 %v196
    %762 = vmatpush.bf16.msra.mxu0 %v192
    %763 = vmatpush.bf16.msra.mxu0 %v188
    %764 = vmatmul.bf16.gmra.mxu0 %v742
    %v765 = vpop.f32.mrf.mxu0
    %v766 = vadd.f32 0.0, %v765
    %v767 = vpop.f32.mrf.mxu0
    %768 = vdwg.mxu0
    %769 = vmatpush.bf16.msra.mxu0 %v217
    %770 = vmatpush.bf16.msra.mxu0 %v213
    %771 = vmatpush.bf16.msra.mxu0 %v209
    %772 = vmatpush.bf16.msra.mxu0 %v205
    %773 = vmatpush.bf16.msra.mxu0 %v201
    %774 = vmatpush.bf16.msra.mxu0 %v197
    %775 = vmatpush.bf16.msra.mxu0 %v193
    %776 = vmatpush.bf16.msra.mxu0 %v189
    %777 = vmatmul.bf16.gmra.mxu0 %v742
    %v778 = vpop.f32.mrf.mxu0
    %v779 = vadd.f32 0.0, %v778
    %v780 = vpop.f32.mrf.mxu0
    %781 = vdwg.mxu0
    %782 = vmatpush.bf16.msra.mxu0 %v218
    %783 = vmatpush.bf16.msra.mxu0 %v214
    %784 = vmatpush.bf16.msra.mxu0 %v210
    %785 = vmatpush.bf16.msra.mxu0 %v206
    %786 = vmatpush.bf16.msra.mxu0 %v202
    %787 = vmatpush.bf16.msra.mxu0 %v198
    %788 = vmatpush.bf16.msra.mxu0 %v194
    %789 = vmatpush.bf16.msra.mxu0 %v190
    %790 = vmatmul.bf16.gmra.mxu0 %v742
    %v791 = vpop.f32.mrf.mxu0
    %v792 = vadd.f32 0.0, %v791
    %v793 = vpop.f32.mrf.mxu0
    %794 = vdwg.mxu0
    %v795 = vadd.f32 %v738, %v753
    %v796 = vadd.f32 %v739, %v766
    %v797 = vadd.f32 %v740, %v779
    %v798 = vadd.f32 %v741, %v792
    %v799 = vmul.f32 %v795, 0.5
    %v800 = vtanh.pop %v799
    %v801 = vmul.f32 %v800, 0.5
    %v802 = vadd.f32 %v801, 0.5
    %v803 = vmul.f32 %v796, 0.5
    %v804 = vtanh.pop %v803
    %v805 = vmul.f32 %v804, 0.5
    %v806 = vadd.f32 %v805, 0.5
    %v807 = vmul.f32 %v797, 0.5
    %v808 = vtanh.pop %v807
    %v809 = vmul.f32 %v808, 0.5
    %v810 = vadd.f32 %v809, 0.5
    %v811 = vtanh.pop %v798
    %v812 = vmul.f32 %v802, %v732
    %v813 = vmul.f32 %v806, %v811
    %v814 = vadd.f32 %v812, %v813
    %v815 = vtanh.pop %v814
    %v816 = vmul.f32 %v810, %v815
    %s817 = scalar_lea.vmem [#allocation3], 112
    %v818 = vld [vmem:[%s817] sm:$0xff]
    %v819 = vld [vmem:[%s817 + $0x8] sm:$0xff]
    %v820 = vunpack.c.l.bf16 %v818
    %v821 = vunpack.c.h.bf16 %v818
    %v822 = vunpack.c.l.bf16 %v819
    %v823 = vunpack.c.h.bf16 %v819
    %v824 = vpack.c.bf16 %v816, %v816
    %825 = vmatpush.bf16.msra.mxu0 %v215
    %826 = vmatpush.bf16.msra.mxu0 %v211
    %827 = vmatpush.bf16.msra.mxu0 %v207
    %828 = vmatpush.bf16.msra.mxu0 %v203
    %829 = vmatpush.bf16.msra.mxu0 %v199
    %830 = vmatpush.bf16.msra.mxu0 %v195
    %831 = vmatpush.bf16.msra.mxu0 %v191
    %832 = vmatpush.bf16.msra.mxu0 %v187
    %833 = vmatmul.bf16.gmra.mxu0 %v824
    %v834 = vpop.f32.mrf.mxu0
    %v835 = vadd.f32 0.0, %v834
    %v836 = vpop.f32.mrf.mxu0
    %837 = vdwg.mxu0
    %838 = vmatpush.bf16.msra.mxu0 %v216
    %839 = vmatpush.bf16.msra.mxu0 %v212
    %840 = vmatpush.bf16.msra.mxu0 %v208
    %841 = vmatpush.bf16.msra.mxu0 %v204
    %842 = vmatpush.bf16.msra.mxu0 %v200
    %843 = vmatpush.bf16.msra.mxu0 %v196
    %844 = vmatpush.bf16.msra.mxu0 %v192
    %845 = vmatpush.bf16.msra.mxu0 %v188
    %846 = vmatmul.bf16.gmra.mxu0 %v824
    %v847 = vpop.f32.mrf.mxu0
    %v848 = vadd.f32 0.0, %v847
    %v849 = vpop.f32.mrf.mxu0
    %850 = vdwg.mxu0
    %851 = vmatpush.bf16.msra.mxu0 %v217
    %852 = vmatpush.bf16.msra.mxu0 %v213
    %853 = vmatpush.bf16.msra.mxu0 %v209
    %854 = vmatpush.bf16.msra.mxu0 %v205
    %855 = vmatpush.bf16.msra.mxu0 %v201
    %856 = vmatpush.bf16.msra.mxu0 %v197
    %857 = vmatpush.bf16.msra.mxu0 %v193
    %858 = vmatpush.bf16.msra.mxu0 %v189
    %859 = vmatmul.bf16.gmra.mxu0 %v824
    %v860 = vpop.f32.mrf.mxu0
    %v861 = vadd.f32 0.0, %v860
    %v862 = vpop.f32.mrf.mxu0
    %863 = vdwg.mxu0
    %864 = vmatpush.bf16.msra.mxu0 %v218
    %865 = vmatpush.bf16.msra.mxu0 %v214
    %866 = vmatpush.bf16.msra.mxu0 %v210
    %867 = vmatpush.bf16.msra.mxu0 %v206
    %868 = vmatpush.bf16.msra.mxu0 %v202
    %869 = vmatpush.bf16.msra.mxu0 %v198
    %870 = vmatpush.bf16.msra.mxu0 %v194
    %871 = vmatpush.bf16.msra.mxu0 %v190
    %872 = vmatmul.bf16.gmra.mxu0 %v824
    %v873 = vpop.f32.mrf.mxu0
    %v874 = vadd.f32 0.0, %v873
    %v875 = vpop.f32.mrf.mxu0
    %876 = vdwg.mxu0
    %v877 = vadd.f32 %v820, %v835
    %v878 = vadd.f32 %v821, %v848
    %v879 = vadd.f32 %v822, %v861
    %v880 = vadd.f32 %v823, %v874
    %v881 = vmul.f32 %v877, 0.5
    %v882 = vtanh.pop %v881
    %v883 = vmul.f32 %v882, 0.5
    %v884 = vadd.f32 %v883, 0.5
    %v885 = vmul.f32 %v878, 0.5
    %v886 = vtanh.pop %v885
    %v887 = vmul.f32 %v886, 0.5
    %v888 = vadd.f32 %v887, 0.5
    %v889 = vmul.f32 %v879, 0.5
    %v890 = vtanh.pop %v889
    %v891 = vmul.f32 %v890, 0.5
    %v892 = vadd.f32 %v891, 0.5
    %v893 = vtanh.pop %v880
    %v894 = vmul.f32 %v884, %v814
    %v895 = vmul.f32 %v888, %v893
    %v896 = vadd.f32 %v894, %v895
    %v897 = vtanh.pop %v896
    %v898 = vmul.f32 %v892, %v897
    %899 = vst [vmem:[#allocation8] sm:$0xff] %v898
    %900 = vst [vmem:[#allocation2] sm:$0xff] %v896
    // Predicated region
    $region22: #{tpu_custom_call.1} parent=1 // pred_check
      _
    $region23: #{tpu_custom_call.1} parent=1 // pred_check_branch
      %902 = sbr.rel (0) target = $region25
    $region24: #{tpu_custom_call.1} parent=1 // pred_region
      %904 = vsyncadd [#allocation5], 0
      %s906 = sshll.u32 [#allocation8], 4
      %s907 = int_to_ptr.vmem [resolvable:$true] %s906
      %s908 = sshll.u32 %s2, 4
      %s909 = int_to_ptr.hbm [resolvable:$true] %s908
      %911 = dma.vmem_to_hbm [thread:$0]  %s907, 128, %s909, [#allocation5]
    $region25: #{tpu_custom_call.1} parent=1 // pred_fallthru
      _
    // Predicated region
    $region26: #{tpu_custom_call.1} parent=1 // pred_check
      _
    $region27: #{tpu_custom_call.1} parent=1 // pred_check_branch
      %913 = sbr.rel (0) target = $region29
    $region28: #{tpu_custom_call.1} parent=1 // pred_region
      %915 = dma.done [#allocation5], 128
    $region29: #{tpu_custom_call.1} parent=1 // pred_fallthru
      _
    %916 = vsyncpa [#allocation4], 1
    %917 = vsyncpa [#allocation7], 1
    %918 = vsyncpa [#allocation5], 1

</llo_original>
